<compile_context>
chip_gen: v6e
topology: v6e:2x2x1
jax: 0.10.0
libtpu: 0.0.40
codegen_flags: <defaults>
</compile_context>

<pallas_src>
import jax
import jax.numpy as jnp
from jax import lax
from jax.experimental import pallas as pl
from jax.experimental.pallas import tpu as pltpu


def _round_up(x, m):
    return ((x + m - 1) // m) * m


def _vmem_capacity_bytes():
    """Per-core VMEM (v5e/v6e: 128 MiB, v7x: 64 MiB); conservative fallback."""
    try:
        return int(pltpu.get_tpu_info().vmem_capacity_bytes)
    except Exception:   # older jax / query unavailable -> v7x-safe default
        return 64 * 1024 * 1024


def _choose_tile_n(n, k, *, n_streams, itemsize=2):
    """Pick the batch tile + scoped-VMEM limit, sized per TPU generation.

    Budget: n_streams embedding streams x 2 pipeline buffers + the small
    (tile_n, 1) id/label/loss blocks + f32 in-kernel temporaries must fit
    comfortably under the scoped-VMEM limit derived from physical VMEM.
    """
    kp = _round_up(k, 128)                         # lane-padded K inside VMEM
    cap = _vmem_capacity_bytes()
    vmem_limit = int(min(0.7 * cap, 100 * 1024 * 1024))
    block_budget = int(0.35 * vmem_limit)          # headroom for f32 temporaries
    per_sample = 2 * (n_streams * 4 * kp * itemsize + 1536) + 64 * kp
    tile_budget = max(128, min(4096, (block_budget // per_sample) // 128 * 128))
    # Keep >= 8 grid steps when the batch allows it so the "parallel" batch axis
    # shards across v7x's 2 TensorCores with >= 4 steps each.
    tile_steps = max(128, (-(-n // 8)) // 128 * 128)
    return min(tile_budget, tile_steps), vmem_limit


# ------------------------------ Pallas kernels --------------------------------
def _hamilton_phi(h_ref, t_ref, r0, r1, r2, r3):
    """phi = sum_k <(head ⊗ r̂), tail> for one (tile_n, K) block; r* are f32."""
    f32 = jnp.float32
    h0 = h_ref[0].astype(f32)
    h1 = h_ref[1].astype(f32)
    h2 = h_ref[2].astype(f32)
    h3 = h_ref[3].astype(f32)
    s = (h0 * r0 - h1 * r1 - h2 * r2 - h3 * r3) * t_ref[0].astype(f32)
    s += (h0 * r1 + h1 * r0 + h2 * r3 - h3 * r2) * t_ref[1].astype(f32)
    s += (h0 * r2 - h1 * r3 + h2 * r0 + h3 * r1) * t_ref[2].astype(f32)
    s += (h0 * r3 + h1 * r2 - h2 * r1 + h3 * r0) * t_ref[3].astype(f32)
    return jnp.sum(s, axis=-1, keepdims=True)          # (tile_n, 1)


def _logistic_loss(phi, y):
    # log(1 + exp(-y*phi)) as a numerically stable softplus.
    z = -y * phi
    return jnp.maximum(z, 0.0) + jnp.log(1.0 + jnp.exp(-jnp.abs(z)))


def _quate_kernel_resident(ids_ref, y_ref, h_ref, t_ref, reln_ref, out_ref):
    # ids_ref : (tile_n, 1) int32   relation row id per sample
    # y_ref   : (tile_n, 1) f32     +1 / -1 labels
    # h/t_ref : (4, tile_n, K)      gathered head / tail quaternion components
    # reln_ref: (4, R_pad, K)       VMEM-resident pre-normalized relation table
    # out_ref : (tile_n, 1) f32     per-sample loss
    f32 = jnp.float32
    tile_n = ids_ref.shape[0]
    r_pad = reln_ref.shape[1]

    # In-kernel relation gather: one_hot(ids) @ table on the (otherwise idle)
    # MXU.  The one-hot selects exact rows (1.0 * v accumulated in f32 is exact).
    ids = ids_ref[...]                                              # (tile_n, 1)
    cols = lax.broadcasted_iota(jnp.int32, (tile_n, r_pad), 1)
    onehot = (cols == ids).astype(reln_ref.dtype)                   # (tile_n, R_pad)
    r0 = jnp.dot(onehot, reln_ref[0], preferred_element_type=f32)   # (tile_n, K)
    r1 = jnp.dot(onehot, reln_ref[1], preferred_element_type=f32)
    r2 = jnp.dot(onehot, reln_ref[2], preferred_element_type=f32)
    r3 = jnp.dot(onehot, reln_ref[3], preferred_element_type=f32)

    phi = _hamilton_phi(h_ref, t_ref, r0, r1, r2, r3)
    out_ref[...] = _logistic_loss(phi, y_ref[...])


def _quate_kernel_streamed(y_ref, h_ref, r_ref, t_ref, out_ref):
    # Fallback for very large relation vocabularies: the already-normalized
    # relation rows are streamed from HBM like head/tail.
    f32 = jnp.float32
    r0 = r_ref[0].astype(f32)
    r1 = r_ref[1].astype(f32)
    r2 = r_ref[2].astype(f32)
    r3 = r_ref[3].astype(f32)
    phi = _hamilton_phi(h_ref, t_ref, r0, r1, r2, r3)
    out_ref[...] = _logistic_loss(phi, y_ref[...])


# ------------------------------ pallas_call wrappers ---------------------------
def quate_loss_resident(rel_ids, y, head, tail, rel_table, *, tile_n, vmem_limit):
    """rel_ids/y: (N_pad, 1); head/tail: (4, N_pad, K); rel_table: (4, R_pad, K)."""
    _, n_pad, k = head.shape
    r_pad = rel_table.shape[1]
    assert n_pad % tile_n == 0, (n_pad, tile_n)
    grid = (n_pad // tile_n,)
    emb_spec = pl.BlockSpec((4, tile_n, k), lambda i: (0, i, 0))
    vec_spec = pl.BlockSpec((tile_n, 1), lambda i: (i, 0))
    return pl.pallas_call(
        _quate_kernel_resident,
        out_shape=jax.ShapeDtypeStruct((n_pad, 1), jnp.float32),
        grid=grid,
        in_specs=[
            vec_spec,                                           # relation ids
            vec_spec,                                           # labels
            emb_spec,                                           # head
            emb_spec,                                           # tail
            pl.BlockSpec((4, r_pad, k), lambda i: (0, 0, 0)),   # resident table
        ],
        out_specs=vec_spec,
        compiler_params=pltpu.CompilerParams(
            dimension_semantics=("parallel",),                  # megacore batch axis
            vmem_limit_bytes=vmem_limit),
    )(rel_ids, y, head, tail, rel_table)


def quate_loss_streamed(y, head, relation, tail, *, tile_n, vmem_limit):
    _, n_pad, k = head.shape
    assert n_pad % tile_n == 0, (n_pad, tile_n)
    grid = (n_pad // tile_n,)
    emb_spec = pl.BlockSpec((4, tile_n, k), lambda i: (0, i, 0))
    vec_spec = pl.BlockSpec((tile_n, 1), lambda i: (i, 0))
    return pl.pallas_call(
        _quate_kernel_streamed,
        out_shape=jax.ShapeDtypeStruct((n_pad, 1), jnp.float32),
        grid=grid,
        in_specs=[vec_spec, emb_spec, emb_spec, emb_spec],
        out_specs=vec_spec,
        compiler_params=pltpu.CompilerParams(
            dimension_semantics=("parallel",),
            vmem_limit_bytes=vmem_limit),
    )(y, head, relation, tail)


# ------------------------------ Model wrapper ----------------------------------
class KGEModelPallas:
    """JAX/Pallas port of the PyTorch QuatE KGEModel forward pass."""

    # Keep the relation table VMEM-resident (MXU one-hot gather) only while the
    # per-sample matmul stays cheaper than streaming rows from HBM on the
    # tightest generation (v5e: ~120 bf16 MACs per HBM byte).
    _MAX_RESIDENT_RELATIONS = 512
    _MAX_RESIDENT_BYTES = 2 * 1024 * 1024

    def __init__(self, nentity, nrelation, hidden_dim, key,
                 param_dtype=jnp.bfloat16):
        self.nentity = nentity
        self.nrelation = nrelation
        self.hidden_dim = hidden_dim
        self.entity_dim = hidden_dim * 4
        self.relation_dim = hidden_dim * 4
        self.lambda_r = 0.05
        self.lambda_e = 0.01
        self.gamma = 12.0
        self.embedding_range = 1.0 / hidden_dim ** 2

        k_ent, k_rel = jax.random.split(key)
        # Planar quaternion layout (4, rows, hidden_dim): the XLA row gather in
        # forward() directly yields the kernel's (4, N, K) layout (no transpose
        # through HBM); bf16 halves the HBM bytes of the gathered streams.
        self.entity_embedding = jax.random.uniform(
            k_ent, (4, nentity, hidden_dim), jnp.float32,
            minval=-self.embedding_range, maxval=self.embedding_range,
        ).astype(param_dtype)
        self.relation_embedding = jax.random.uniform(
            k_rel, (4, nrelation, hidden_dim), jnp.float32,
            minval=-self.embedding_range, maxval=self.embedding_range,
        ).astype(param_dtype)

    def normalized_relation_table(self):
        # F.normalize(relation, p=2, dim=2) hoisted out of the per-sample hot
        # loop: normalization is per (row, hidden index) quaternion, so it can
        # be applied once to the table instead of once per gathered sample.
        r = self.relation_embedding.astype(jnp.float32)           # (4, R, K)
        nrm = jnp.sqrt(jnp.sum(r * r, axis=0, keepdims=True))
        return (r / jnp.maximum(nrm, 1e-12)).astype(self.relation_embedding.dtype)

    def forward(self, sample, Y, tile_n=None, relation_resident=None):
        # sample: (N, 3) int32 triples; Y: (N,) +1 / -1 labels.
        n = sample.shape[0]
        k = self.hidden_dim
        if relation_resident is None:
            table_bytes = (4 * _round_up(self.nrelation, 128) * k
                           * self.relation_embedding.dtype.itemsize)
            relation_resident = (self.nrelation <= self._MAX_RESIDENT_RELATIONS
                                 and table_bytes <= self._MAX_RESIDENT_BYTES)

        n_streams = 2 if relation_resident else 3
        auto_tile, vmem_limit = _choose_tile_n(
            n, k, n_streams=n_streams,
            itemsize=self.entity_embedding.dtype.itemsize)
        tile = auto_tile if tile_n is None else int(tile_n)
        assert tile % 16 == 0, tile
        num_tiles = -(-n // tile)
        if tile_n is None and num_tiles > 1 and num_tiles % 2 == 1:
            # v7x megacore balance: even step count by shrinking the tile.
            num_tiles += 1
            tile = _round_up(-(-n // num_tiles), 16)
        n_pad = num_tiles * tile

        y = Y.astype(jnp.float32)
        if n_pad != n:                 # pad only the cheap index/label arrays
            pad = n_pad - n
            sample = jnp.concatenate(
                [sample, jnp.zeros((pad, 3), sample.dtype)], axis=0)
            y = jnp.concatenate([y, jnp.ones((pad,), jnp.float32)], axis=0)

        # Head/tail row gathers stay in XLA (see header: per-row DMA fusion is
        # descriptor-bound for ~1 KiB rows); planar tables give (4, N, K) directly.
        head = jnp.take(self.entity_embedding, sample[:, 0], axis=1)
        tail = jnp.take(self.entity_embedding, sample[:, 2], axis=1)
        rel_norm = self.normalized_relation_table()
        y2 = y.reshape(n_pad, 1)

        if relation_resident:
            r_pad = _round_up(self.nrelation, 128)
            rel_table = jnp.pad(
                rel_norm, ((0, 0), (0, r_pad - self.nrelation), (0, 0)))
            rel_ids = sample[:, 1].astype(jnp.int32).reshape(n_pad, 1)
            loss = quate_loss_resident(rel_ids, y2, head, tail, rel_table,
                                       tile_n=tile, vmem_limit=vmem_limit)
        else:
            relation = jnp.take(rel_norm, sample[:, 1], axis=1)
            loss = quate_loss_streamed(y2, head, relation, tail,
                                       tile_n=tile, vmem_limit=vmem_limit)
        return loss[:n, 0], Y


# Pure-JAX reference of the PyTorch forward (reads the same bf16 tables and
# mirrors the kernel's bf16 storage of the pre-normalized relation rows).
def quate_ref(model, sample, Y):
    f32 = jnp.float32
    h = jnp.take(model.entity_embedding, sample[:, 0], axis=1).astype(f32)
    r = jnp.take(model.relation_embedding, sample[:, 1], axis=1).astype(f32)
    t = jnp.take(model.entity_embedding, sample[:, 2], axis=1).astype(f32)
    nrm = jnp.sqrt(jnp.sum(r * r, axis=0, keepdims=True))
    r = r / jnp.maximum(nrm, 1e-12)
    r = r.astype(model.relation_embedding.dtype).astype(f32)   # bf16 param storage
    p0 = h[0] * r[0] - h[1] * r[1] - h[2] * r[2] - h[3] * r[3]
    p1 = h[0] * r[1] + h[1] * r[0] + h[2] * r[3] - h[3] * r[2]
    p2 = h[0] * r[2] - h[1] * r[3] + h[2] * r[0] + h[3] * r[1]
    p3 = h[0] * r[3] + h[1] * r[2] - h[2] * r[1] + h[3] * r[0]
    phi = jnp.sum(p0 * t[0] + p1 * t[1] + p2 * t[2] + p3 * t[3], axis=-1)
    return jnp.log(1.0 + jnp.exp(-Y.astype(f32) * phi))


if __name__ == "__main__":
    key = jax.random.PRNGKey(0)
    k_model, k_tab_e, k_tab_r, k_samp, k_y = jax.random.split(key, 5)

    def make_batch(key_s, key_y, batch, nentity, nrelation):
        heads = jax.random.randint(key_s, (batch,), 0, nentity)
        rels = jax.random.randint(jax.random.fold_in(key_s, 1), (batch,), 0, nrelation)
        tails = jax.random.randint(jax.random.fold_in(key_s, 2), (batch,), 0, nentity)
        sample = jnp.stack([heads, rels, tails], axis=1).astype(jnp.int32)
        labels = jnp.where(jax.random.bernoulli(key_y, 0.5, (batch,)), 1.0, -1.0)
        return sample, labels.astype(jnp.float32)

    # --- check 1: small shapes (hidden_dim=32, batch=8), resident-relation path.
    nentity, nrelation, hidden_dim, batch = 20, 5, 32, 8
    model = KGEModelPallas(nentity, nrelation, hidden_dim, k_model)
    # Re-draw the test tables at a larger scale so phi is O(0.1) and the check
    # against the reference is numerically meaningful (the spec's 1/hidden^2
    # init pins every loss to ~log(2) +- 1e-4).
    model.entity_embedding = jax.random.uniform(
        k_tab_e, (4, nentity, hidden_dim), jnp.float32, minval=-0.2, maxval=0.2
    ).astype(jnp.bfloat16)
    model.relation_embedding = jax.random.uniform(
        k_tab_r, (4, nrelation, hidden_dim), jnp.float32, minval=-0.2, maxval=0.2
    ).astype(jnp.bfloat16)

    sample, Y = make_batch(k_samp, k_y, batch, nentity, nrelation)
    loss, y_out = model.forward(sample, Y)
    loss = jax.block_until_ready(loss)
    ref = quate_ref(model, sample, Y)
    assert loss.shape == (batch,)
    assert jnp.allclose(loss, ref, atol=1e-4, rtol=1e-4), (loss, ref)
    assert jnp.array_equal(y_out, Y)

    # --- check 2: hidden_dim=128, batch=200 -> 2 grid steps, resident path.
    nentity2, nrelation2, hidden_dim2, batch2 = 300, 40, 128, 200
    model2 = KGEModelPallas(nentity2, nrelation2, hidden_dim2,
                            jax.random.fold_in(k_model, 1))
    model2.entity_embedding = jax.random.uniform(
        jax.random.fold_in(k_tab_e, 1), (4, nentity2, hidden_dim2), jnp.float32,
        minval=-0.05, maxval=0.05).astype(jnp.bfloat16)
    model2.relation_embedding = jax.random.uniform(
        jax.random.fold_in(k_tab_r, 1), (4, nrelation2, hidden_dim2), jnp.float32,
        minval=-0.05, maxval=0.05).astype(jnp.bfloat16)
    sample2, Y2 = make_batch(jax.random.fold_in(k_samp, 1),
                             jax.random.fold_in(k_y, 1),
                             batch2, nentity2, nrelation2)
    loss2, _ = model2.forward(sample2, Y2)
    loss2 = jax.block_until_ready(loss2)
    ref2 = quate_ref(model2, sample2, Y2)
    assert loss2.shape == (batch2,)
    assert jnp.allclose(loss2, ref2, atol=1e-4, rtol=1e-4), \
        float(jnp.max(jnp.abs(loss2 - ref2)))

    # --- check 3: streamed-relation fallback kernel on the same data.
    loss3, _ = model2.forward(sample2, Y2, relation_resident=False)
    loss3 = jax.block_until_ready(loss3)
    assert jnp.allclose(loss3, ref2, atol=1e-4, rtol=1e-4), \
        float(jnp.max(jnp.abs(loss3 - ref2)))

    print("KERNEL_OK")
</pallas_src>

<mosaic_0001>
module attributes {stable_mosaic.version = 11 : i64} {
  func.func @_quate_kernel_resident(%arg0: i32, %arg1: memref<128x1xi32, #tpu.memory_space<vmem>>, %arg2: memref<128x1xf32, #tpu.memory_space<vmem>>, %arg3: memref<4x128x32xbf16, #tpu.memory_space<vmem>>, %arg4: memref<4x128x32xbf16, #tpu.memory_space<vmem>>, %arg5: memref<4x128x32xbf16, #tpu.memory_space<vmem>>, %arg6: memref<128x1xf32, #tpu.memory_space<vmem>>) attributes {dimension_semantics = [#tpu.dimension_semantics<parallel>], iteration_bounds = array<i64: 1>, scalar_prefetch = 0 : i64, scratch_operands = 0 : i64, tpu.core_type = #tpu.core_type<tc>, window_params = [{transform_indices = @transform_0, window_bounds = array<i64: 128, 1>}, {transform_indices = @transform_1, window_bounds = array<i64: 128, 1>}, {transform_indices = @transform_2, window_bounds = array<i64: 4, 128, 32>}, {transform_indices = @transform_3, window_bounds = array<i64: 4, 128, 32>}, {pipeline_mode = #tpu.pipeline_mode<synchronous>, transform_indices = @transform_4, window_bounds = array<i64: 4, 128, 32>}, {transform_indices = @transform_5, window_bounds = array<i64: 128, 1>}]} {
    %c0 = arith.constant 0 : index
    %c0_0 = arith.constant 0 : index
    %0 = vector.load %arg1[%c0, %c0_0] : memref<128x1xi32, #tpu.memory_space<vmem>>, vector<128x1xi32>
    %1 = tpu.iota {dimensions = array<i32: 1>} : vector<128x128xi32>
    %2 = vector.broadcast %0 : vector<128x1xi32> to vector<128x128xi32>
    %3 = arith.cmpi eq, %1, %2 : vector<128x128xi32>
    %4 = arith.extui %3 : vector<128x128xi1> to vector<128x128xi32>
    %5 = arith.sitofp %4 : vector<128x128xi32> to vector<128x128xf32>
    %6 = arith.truncf %5 : vector<128x128xf32> to vector<128x128xbf16>
    %c0_1 = arith.constant 0 : index
    %c0_2 = arith.constant 0 : index
    %c0_3 = arith.constant 0 : index
    %7 = vector.load %arg5[%c0_1, %c0_2, %c0_3] : memref<4x128x32xbf16, #tpu.memory_space<vmem>>, vector<1x128x32xbf16>
    %8 = vector.shape_cast %7 : vector<1x128x32xbf16> to vector<128x32xbf16>
    %cst = arith.constant dense<0.000000e+00> : vector<128x32xf32>
    %9 = tpu.matmul %6, %8, %cst {dimension_numbers = #tpu.dot_dimension_numbers<[1], [0], [0], [1], [0, 0, 1, 1], [], []>} : vector<128x128xbf16>, vector<128x32xbf16>, vector<128x32xf32> -> vector<128x32xf32>
    %c1 = arith.constant 1 : index
    %c0_4 = arith.constant 0 : index
    %c0_5 = arith.constant 0 : index
    %10 = vector.load %arg5[%c1, %c0_4, %c0_5] : memref<4x128x32xbf16, #tpu.memory_space<vmem>>, vector<1x128x32xbf16>
    %11 = vector.shape_cast %10 : vector<1x128x32xbf16> to vector<128x32xbf16>
    %cst_6 = arith.constant dense<0.000000e+00> : vector<128x32xf32>
    %12 = tpu.matmul %6, %11, %cst_6 {dimension_numbers = #tpu.dot_dimension_numbers<[1], [0], [0], [1], [0, 0, 1, 1], [], []>} : vector<128x128xbf16>, vector<128x32xbf16>, vector<128x32xf32> -> vector<128x32xf32>
    %c2 = arith.constant 2 : index
    %c0_7 = arith.constant 0 : index
    %c0_8 = arith.constant 0 : index
    %13 = vector.load %arg5[%c2, %c0_7, %c0_8] : memref<4x128x32xbf16, #tpu.memory_space<vmem>>, vector<1x128x32xbf16>
    %14 = vector.shape_cast %13 : vector<1x128x32xbf16> to vector<128x32xbf16>
    %cst_9 = arith.constant dense<0.000000e+00> : vector<128x32xf32>
    %15 = tpu.matmul %6, %14, %cst_9 {dimension_numbers = #tpu.dot_dimension_numbers<[1], [0], [0], [1], [0, 0, 1, 1], [], []>} : vector<128x128xbf16>, vector<128x32xbf16>, vector<128x32xf32> -> vector<128x32xf32>
    %c3 = arith.constant 3 : index
    %c0_10 = arith.constant 0 : index
    %c0_11 = arith.constant 0 : index
    %16 = vector.load %arg5[%c3, %c0_10, %c0_11] : memref<4x128x32xbf16, #tpu.memory_space<vmem>>, vector<1x128x32xbf16>
    %17 = vector.shape_cast %16 : vector<1x128x32xbf16> to vector<128x32xbf16>
    %cst_12 = arith.constant dense<0.000000e+00> : vector<128x32xf32>
    %18 = tpu.matmul %6, %17, %cst_12 {dimension_numbers = #tpu.dot_dimension_numbers<[1], [0], [0], [1], [0, 0, 1, 1], [], []>} : vector<128x128xbf16>, vector<128x32xbf16>, vector<128x32xf32> -> vector<128x32xf32>
    %c0_13 = arith.constant 0 : index
    %c0_14 = arith.constant 0 : index
    %c0_15 = arith.constant 0 : index
    %19 = vector.load %arg3[%c0_13, %c0_14, %c0_15] : memref<4x128x32xbf16, #tpu.memory_space<vmem>>, vector<1x128x32xbf16>
    %20 = vector.shape_cast %19 : vector<1x128x32xbf16> to vector<128x32xbf16>
    %21 = arith.extf %20 : vector<128x32xbf16> to vector<128x32xf32>
    %c1_16 = arith.constant 1 : index
    %c0_17 = arith.constant 0 : index
    %c0_18 = arith.constant 0 : index
    %22 = vector.load %arg3[%c1_16, %c0_17, %c0_18] : memref<4x128x32xbf16, #tpu.memory_space<vmem>>, vector<1x128x32xbf16>
    %23 = vector.shape_cast %22 : vector<1x128x32xbf16> to vector<128x32xbf16>
    %24 = arith.extf %23 : vector<128x32xbf16> to vector<128x32xf32>
    %c2_19 = arith.constant 2 : index
    %c0_20 = arith.constant 0 : index
    %c0_21 = arith.constant 0 : index
    %25 = vector.load %arg3[%c2_19, %c0_20, %c0_21] : memref<4x128x32xbf16, #tpu.memory_space<vmem>>, vector<1x128x32xbf16>
    %26 = vector.shape_cast %25 : vector<1x128x32xbf16> to vector<128x32xbf16>
    %27 = arith.extf %26 : vector<128x32xbf16> to vector<128x32xf32>
    %c3_22 = arith.constant 3 : index
    %c0_23 = arith.constant 0 : index
    %c0_24 = arith.constant 0 : index
    %28 = vector.load %arg3[%c3_22, %c0_23, %c0_24] : memref<4x128x32xbf16, #tpu.memory_space<vmem>>, vector<1x128x32xbf16>
    %29 = vector.shape_cast %28 : vector<1x128x32xbf16> to vector<128x32xbf16>
    %30 = arith.extf %29 : vector<128x32xbf16> to vector<128x32xf32>
    %31 = arith.mulf %21, %9 : vector<128x32xf32>
    %32 = arith.mulf %24, %12 : vector<128x32xf32>
    %33 = arith.subf %31, %32 : vector<128x32xf32>
    %34 = arith.mulf %27, %15 : vector<128x32xf32>
    %35 = arith.subf %33, %34 : vector<128x32xf32>
    %36 = arith.mulf %30, %18 : vector<128x32xf32>
    %37 = arith.subf %35, %36 : vector<128x32xf32>
    %c0_25 = arith.constant 0 : index
    %c0_26 = arith.constant 0 : index
    %c0_27 = arith.constant 0 : index
    %38 = vector.load %arg4[%c0_25, %c0_26, %c0_27] : memref<4x128x32xbf16, #tpu.memory_space<vmem>>, vector<1x128x32xbf16>
    %39 = vector.shape_cast %38 : vector<1x128x32xbf16> to vector<128x32xbf16>
    %40 = arith.extf %39 : vector<128x32xbf16> to vector<128x32xf32>
    %41 = arith.mulf %37, %40 : vector<128x32xf32>
    %42 = arith.mulf %21, %12 : vector<128x32xf32>
    %43 = arith.mulf %24, %9 : vector<128x32xf32>
    %44 = arith.addf %42, %43 : vector<128x32xf32>
    %45 = arith.mulf %27, %18 : vector<128x32xf32>
    %46 = arith.addf %44, %45 : vector<128x32xf32>
    %47 = arith.mulf %30, %15 : vector<128x32xf32>
    %48 = arith.subf %46, %47 : vector<128x32xf32>
    %c1_28 = arith.constant 1 : index
    %c0_29 = arith.constant 0 : index
    %c0_30 = arith.constant 0 : index
    %49 = vector.load %arg4[%c1_28, %c0_29, %c0_30] : memref<4x128x32xbf16, #tpu.memory_space<vmem>>, vector<1x128x32xbf16>
    %50 = vector.shape_cast %49 : vector<1x128x32xbf16> to vector<128x32xbf16>
    %51 = arith.extf %50 : vector<128x32xbf16> to vector<128x32xf32>
    %52 = arith.mulf %48, %51 : vector<128x32xf32>
    %53 = arith.addf %41, %52 : vector<128x32xf32>
    %54 = arith.mulf %21, %15 : vector<128x32xf32>
    %55 = arith.mulf %24, %18 : vector<128x32xf32>
    %56 = arith.subf %54, %55 : vector<128x32xf32>
    %57 = arith.mulf %27, %9 : vector<128x32xf32>
    %58 = arith.addf %56, %57 : vector<128x32xf32>
    %59 = arith.mulf %30, %12 : vector<128x32xf32>
    %60 = arith.addf %58, %59 : vector<128x32xf32>
    %c2_31 = arith.constant 2 : index
    %c0_32 = arith.constant 0 : index
    %c0_33 = arith.constant 0 : index
    %61 = vector.load %arg4[%c2_31, %c0_32, %c0_33] : memref<4x128x32xbf16, #tpu.memory_space<vmem>>, vector<1x128x32xbf16>
    %62 = vector.shape_cast %61 : vector<1x128x32xbf16> to vector<128x32xbf16>
    %63 = arith.extf %62 : vector<128x32xbf16> to vector<128x32xf32>
    %64 = arith.mulf %60, %63 : vector<128x32xf32>
    %65 = arith.addf %53, %64 : vector<128x32xf32>
    %66 = arith.mulf %21, %18 : vector<128x32xf32>
    %67 = arith.mulf %24, %15 : vector<128x32xf32>
    %68 = arith.addf %66, %67 : vector<128x32xf32>
    %69 = arith.mulf %27, %12 : vector<128x32xf32>
    %70 = arith.subf %68, %69 : vector<128x32xf32>
    %71 = arith.mulf %30, %9 : vector<128x32xf32>
    %72 = arith.addf %70, %71 : vector<128x32xf32>
    %c3_34 = arith.constant 3 : index
    %c0_35 = arith.constant 0 : index
    %c0_36 = arith.constant 0 : index
    %73 = vector.load %arg4[%c3_34, %c0_35, %c0_36] : memref<4x128x32xbf16, #tpu.memory_space<vmem>>, vector<1x128x32xbf16>
    %74 = vector.shape_cast %73 : vector<1x128x32xbf16> to vector<128x32xbf16>
    %75 = arith.extf %74 : vector<128x32xbf16> to vector<128x32xf32>
    %76 = arith.mulf %72, %75 : vector<128x32xf32>
    %77 = arith.addf %65, %76 : vector<128x32xf32>
    %cst_37 = arith.constant dense<0.000000e+00> : vector<128xf32>
    %78 = vector.multi_reduction <add>, %77, %cst_37 [1] : vector<128x32xf32> to vector<128xf32>
    %79 = vector.shape_cast %78 : vector<128xf32> to vector<128x1xf32>
    %c0_38 = arith.constant 0 : index
    %c0_39 = arith.constant 0 : index
    %80 = vector.load %arg2[%c0_38, %c0_39] : memref<128x1xf32, #tpu.memory_space<vmem>>, vector<128x1xf32>
    %cst_40 = arith.constant 0.000000e+00 : f32
    %81 = vector.broadcast %cst_40 : f32 to vector<128x1xf32>
    %82 = arith.subf %81, %80 : vector<128x1xf32>
    %83 = arith.mulf %82, %79 : vector<128x1xf32>
    %cst_41 = arith.constant 0.000000e+00 : f32
    %84 = vector.broadcast %cst_41 : f32 to vector<128x1xf32>
    %85 = arith.maximumf %83, %84 : vector<128x1xf32>
    %86 = math.absf %83 : vector<128x1xf32>
    %cst_42 = arith.constant 0.000000e+00 : f32
    %87 = vector.broadcast %cst_42 : f32 to vector<128x1xf32>
    %88 = arith.subf %87, %86 : vector<128x1xf32>
    %89 = math.exp %88 : vector<128x1xf32>
    %cst_43 = arith.constant 1.000000e+00 : f32
    %90 = vector.broadcast %cst_43 : f32 to vector<128x1xf32>
    %91 = arith.addf %90, %89 : vector<128x1xf32>
    %92 = math.log %91 : vector<128x1xf32>
    %93 = arith.addf %85, %92 : vector<128x1xf32>
    %c0_44 = arith.constant 0 : index
    %c0_45 = arith.constant 0 : index
    %94 = vector.load %arg6[%c0_44, %c0_45] : memref<128x1xf32, #tpu.memory_space<vmem>>, vector<128x1xf32>
    tpu.vector_store %arg6[%c0_44, %c0_45], %93 {strides = array<i32>} : memref<128x1xf32, #tpu.memory_space<vmem>>, vector<128x1xf32>,
    return
  }
  func.func @transform_0(%arg0: i32) -> (i32, i32) {
    %c0_i32 = arith.constant 0 : i32
    %c0_i32_0 = arith.constant 0 : i32
    return %arg0, %c0_i32 : i32, i32
  }
  func.func @transform_1(%arg0: i32) -> (i32, i32) {
    %c0_i32 = arith.constant 0 : i32
    %c0_i32_0 = arith.constant 0 : i32
    return %arg0, %c0_i32 : i32, i32
  }
  func.func @transform_2(%arg0: i32) -> (i32, i32, i32) {
    %c0_i32 = arith.constant 0 : i32
    %c0_i32_0 = arith.constant 0 : i32
    %c0_i32_1 = arith.constant 0 : i32
    return %c0_i32, %arg0, %c0_i32_0 : i32, i32, i32
  }
  func.func @transform_3(%arg0: i32) -> (i32, i32, i32) {
    %c0_i32 = arith.constant 0 : i32
    %c0_i32_0 = arith.constant 0 : i32
    %c0_i32_1 = arith.constant 0 : i32
    return %c0_i32, %arg0, %c0_i32_0 : i32, i32, i32
  }
  func.func @transform_4(%arg0: i32) -> (i32, i32, i32) {
    %c0_i32 = arith.constant 0 : i32
    %c0_i32_0 = arith.constant 0 : i32
    %c0_i32_1 = arith.constant 0 : i32
    %c0_i32_2 = arith.constant 0 : i32
    return %c0_i32, %c0_i32_0, %c0_i32_1 : i32, i32, i32
  }
  func.func @transform_5(%arg0: i32) -> (i32, i32) {
    %c0_i32 = arith.constant 0 : i32
    %c0_i32_0 = arith.constant 0 : i32
    return %arg0, %c0_i32 : i32, i32
  }
}

</mosaic_0001>

<llo_original>
// kernel: tpu_custom_call.1
$region0: #{tpu_custom_call.1}
  #allocation0 [shape = 'u32[]', space=smem, size = 0x4, offset = 0x4, fixed_abs, tag = 'smem constant byte address 0x4 - core index']
  #allocation1 [shape = 'u32[144,128]{1,0:T(1,128)}', space=vmem, size = 0x12000, scoped, tag = 'internal scratch']
  %s0 = inlined_call_operand.vmem [shape: s32[128,1], index: 0, kind: input, shape index: {}]
  %s1 = inlined_call_operand.vmem [shape: f32[128,1], index: 1, kind: input, shape index: {}]
  %s2 = inlined_call_operand.vmem [shape: bf16[4,128,32], index: 2, kind: input, shape index: {}]
  %s3 = inlined_call_operand.vmem [shape: bf16[4,128,32], index: 3, kind: input, shape index: {}]
  %s4 = inlined_call_operand.vmem [shape: bf16[4,128,32], index: 4, kind: input, shape index: {}]
  %s5 = inlined_call_operand.vmem [shape: f32[128,1], index: 5, kind: output, shape index: {}]
  %s6 = sld [smem:[#allocation0]]
  $region30: #{tpu_custom_call.1} parent=0
    _
  %s8 = ssub.s32 1, %s6
  %s9 = scalar_select 0, %s8, %s6
  // Predicated region
  $region2: #{tpu_custom_call.1} parent=0 // pred_check
    _
  $region3: #{tpu_custom_call.1} parent=0 // pred_check_branch
    %11 = sbr.rel (0) target = $region5
  $region4: #{tpu_custom_call.1} parent=0 // pred_region
    _
  $region5: #{tpu_custom_call.1} parent=0 // pred_fallthru
    _
  // Predicated region
  $region6: #{tpu_custom_call.1} parent=0 // pred_check
    _
  $region7: #{tpu_custom_call.1} parent=0 // pred_check_branch
    %13 = sbr.rel (0) target = $region9
  $region8: #{tpu_custom_call.1} parent=0 // pred_region
    _
  $region9: #{tpu_custom_call.1} parent=0 // pred_fallthru
    _
  // Predicated region
  $region10: #{tpu_custom_call.1} parent=0 // pred_check
    _
  $region11: #{tpu_custom_call.1} parent=0 // pred_check_branch
    %15 = sbr.rel (0) target = $region13
  $region12: #{tpu_custom_call.1} parent=0 // pred_region
    _
  $region13: #{tpu_custom_call.1} parent=0 // pred_fallthru
    _
  // Predicated region
  $region14: #{tpu_custom_call.1} parent=0 // pred_check
    _
  $region15: #{tpu_custom_call.1} parent=0 // pred_check_branch
    %17 = sbr.rel (0) target = $region17
  $region16: #{tpu_custom_call.1} parent=0 // pred_region
    _
  $region17: #{tpu_custom_call.1} parent=0 // pred_fallthru
    _
  // Predicated region
  $region18: #{tpu_custom_call.1} parent=0 // pred_check
    _
  $region19: #{tpu_custom_call.1} parent=0 // pred_check_branch
    %19 = sbr.rel (0) target = $region21
  $region20: #{tpu_custom_call.1} parent=0 // pred_region
    _
  $region21: #{tpu_custom_call.1} parent=0 // pred_fallthru
    _
  %v21 = vld [vmem:[%s0] sm:$0xff]
  %v22 = vld [vmem:[%s0 + $0x8] sm:$0xff]
  %v23 = vld [vmem:[%s0 + $0x10] sm:$0xff]
  %v24 = vld [vmem:[%s0 + $0x18] sm:$0xff]
  %v25 = vld [vmem:[%s0 + $0x20] sm:$0xff]
  %v26 = vld [vmem:[%s0 + $0x28] sm:$0xff]
  %v27 = vld [vmem:[%s0 + $0x30] sm:$0xff]
  %v28 = vld [vmem:[%s0 + $0x38] sm:$0xff]
  %v29 = vld [vmem:[%s0 + $0x40] sm:$0xff]
  %v30 = vld [vmem:[%s0 + $0x48] sm:$0xff]
  %v31 = vld [vmem:[%s0 + $0x50] sm:$0xff]
  %v32 = vld [vmem:[%s0 + $0x58] sm:$0xff]
  %v33 = vld [vmem:[%s0 + $0x60] sm:$0xff]
  %v34 = vld [vmem:[%s0 + $0x68] sm:$0xff]
  %v35 = vld [vmem:[%s0 + $0x70] sm:$0xff]
  %v36 = vld [vmem:[%s0 + $0x78] sm:$0xff]
  %v37 = vlaneseq
  %v38 = vand.u32 %v37, 127
  %39 = vset.pattern.permute.xlu0 0
  %40 = vperm.xlu0 %39, %v21
  %v41 = vpop.permute.xlu0 %40
  %42 = vset.pattern.permute.xlu0 0
  %43 = vperm.xlu0 %42, %v22
  %v44 = vpop.permute.xlu0 %43
  %45 = vset.pattern.permute.xlu0 0
  %46 = vperm.xlu0 %45, %v23
  %v47 = vpop.permute.xlu0 %46
  %48 = vset.pattern.permute.xlu0 0
  %49 = vperm.xlu0 %48, %v24
  %v50 = vpop.permute.xlu0 %49
  %51 = vset.pattern.permute.xlu0 0
  %52 = vperm.xlu0 %51, %v25
  %v53 = vpop.permute.xlu0 %52
  %54 = vset.pattern.permute.xlu0 0
  %55 = vperm.xlu0 %54, %v26
  %v56 = vpop.permute.xlu0 %55
  %57 = vset.pattern.permute.xlu0 0
  %58 = vperm.xlu0 %57, %v27
  %v59 = vpop.permute.xlu0 %58
  %60 = vset.pattern.permute.xlu0 0
  %61 = vperm.xlu0 %60, %v28
  %v62 = vpop.permute.xlu0 %61
  %63 = vset.pattern.permute.xlu0 0
  %64 = vperm.xlu0 %63, %v29
  %v65 = vpop.permute.xlu0 %64
  %66 = vset.pattern.permute.xlu0 0
  %67 = vperm.xlu0 %66, %v30
  %v68 = vpop.permute.xlu0 %67
  %69 = vset.pattern.permute.xlu0 0
  %70 = vperm.xlu0 %69, %v31
  %v71 = vpop.permute.xlu0 %70
  %72 = vset.pattern.permute.xlu0 0
  %73 = vperm.xlu0 %72, %v32
  %v74 = vpop.permute.xlu0 %73
  %75 = vset.pattern.permute.xlu0 0
  %76 = vperm.xlu0 %75, %v33
  %v77 = vpop.permute.xlu0 %76
  %78 = vset.pattern.permute.xlu0 0
  %79 = vperm.xlu0 %78, %v34
  %v80 = vpop.permute.xlu0 %79
  %81 = vset.pattern.permute.xlu0 0
  %82 = vperm.xlu0 %81, %v35
  %v83 = vpop.permute.xlu0 %82
  %84 = vset.pattern.permute.xlu0 0
  %85 = vperm.xlu0 %84, %v36
  %v86 = vpop.permute.xlu0 %85
  %vm87 = vcmp.eq.s32.totalorder %v38, %v41
  %vm88 = vcmp.eq.s32.totalorder %v38, %v44
  %vm89 = vcmp.eq.s32.totalorder %v38, %v47
  %vm90 = vcmp.eq.s32.totalorder %v38, %v50
  %vm91 = vcmp.eq.s32.totalorder %v38, %v53
  %vm92 = vcmp.eq.s32.totalorder %v38, %v56
  %vm93 = vcmp.eq.s32.totalorder %v38, %v59
  %vm94 = vcmp.eq.s32.totalorder %v38, %v62
  %vm95 = vcmp.eq.s32.totalorder %v38, %v65
  %vm96 = vcmp.eq.s32.totalorder %v38, %v68
  %vm97 = vcmp.eq.s32.totalorder %v38, %v71
  %vm98 = vcmp.eq.s32.totalorder %v38, %v74
  %vm99 = vcmp.eq.s32.totalorder %v38, %v77
  %vm100 = vcmp.eq.s32.totalorder %v38, %v80
  %vm101 = vcmp.eq.s32.totalorder %v38, %v83
  %vm102 = vcmp.eq.s32.totalorder %v38, %v86
  %v103 = vsel %vm87, 1, 0
  %v104 = vsel %vm88, 1, 0
  %v105 = vsel %vm89, 1, 0
  %v106 = vsel %vm90, 1, 0
  %v107 = vsel %vm91, 1, 0
  %v108 = vsel %vm92, 1, 0
  %v109 = vsel %vm93, 1, 0
  %v110 = vsel %vm94, 1, 0
  %v111 = vsel %vm95, 1, 0
  %v112 = vsel %vm96, 1, 0
  %v113 = vsel %vm97, 1, 0
  %v114 = vsel %vm98, 1, 0
  %v115 = vsel %vm99, 1, 0
  %v116 = vsel %vm100, 1, 0
  %v117 = vsel %vm101, 1, 0
  %v118 = vsel %vm102, 1, 0
  %v119 = vcvt.s32.f32 %v103
  %v120 = vcvt.s32.f32 %v104
  %v121 = vcvt.s32.f32 %v105
  %v122 = vcvt.s32.f32 %v106
  %v123 = vcvt.s32.f32 %v107
  %v124 = vcvt.s32.f32 %v108
  %v125 = vcvt.s32.f32 %v109
  %v126 = vcvt.s32.f32 %v110
  %v127 = vcvt.s32.f32 %v111
  %v128 = vcvt.s32.f32 %v112
  %v129 = vcvt.s32.f32 %v113
  %v130 = vcvt.s32.f32 %v114
  %v131 = vcvt.s32.f32 %v115
  %v132 = vcvt.s32.f32 %v116
  %v133 = vcvt.s32.f32 %v117
  %v134 = vcvt.s32.f32 %v118
  %v135 = vpack.c.bf16 %v120, %v119
  %v136 = vpack.c.bf16 %v122, %v121
  %v137 = vpack.c.bf16 %v124, %v123
  %v138 = vpack.c.bf16 %v126, %v125
  %v139 = vpack.c.bf16 %v128, %v127
  %v140 = vpack.c.bf16 %v130, %v129
  %v141 = vpack.c.bf16 %v132, %v131
  %v142 = vpack.c.bf16 %v134, %v133
  %v143 = vld [vmem:[%s4] sm:$0xf]
  %v144 = vld [vmem:[%s4 + $0x4] sm:$0xf]
  %v145 = vld [vmem:[%s4 + $0x8] sm:$0xf]
  %v146 = vld [vmem:[%s4 + $0xc] sm:$0xf]
  %v147 = vld [vmem:[%s4 + $0x10] sm:$0xf]
  %v148 = vld [vmem:[%s4 + $0x14] sm:$0xf]
  %v149 = vld [vmem:[%s4 + $0x18] sm:$0xf]
  %v150 = vld [vmem:[%s4 + $0x1c] sm:$0xf]
  %v151 = vld [vmem:[%s4 + $0x20] sm:$0xf]
  %v152 = vld [vmem:[%s4 + $0x24] sm:$0xf]
  %v153 = vld [vmem:[%s4 + $0x28] sm:$0xf]
  %v154 = vld [vmem:[%s4 + $0x2c] sm:$0xf]
  %v155 = vld [vmem:[%s4 + $0x30] sm:$0xf]
  %v156 = vld [vmem:[%s4 + $0x34] sm:$0xf]
  %v157 = vld [vmem:[%s4 + $0x38] sm:$0xf]
  %v158 = vld [vmem:[%s4 + $0x3c] sm:$0xf]
  %v175 = vunpack.c.l.b16 %v143
  %v176 = vunpack.c.l.b16 %v144
  %v177 = vunpack.c.l.b16 %v145
  %v178 = vunpack.c.l.b16 %v146
  %v179 = vunpack.c.l.b16 %v147
  %v180 = vunpack.c.l.b16 %v148
  %v181 = vunpack.c.l.b16 %v149
  %v182 = vunpack.c.l.b16 %v150
  %v183 = vunpack.c.l.b16 %v151
  %v184 = vunpack.c.l.b16 %v152
  %v185 = vunpack.c.l.b16 %v153
  %v186 = vunpack.c.l.b16 %v154
  %v187 = vunpack.c.l.b16 %v155
  %v188 = vunpack.c.l.b16 %v156
  %v189 = vunpack.c.l.b16 %v157
  %v190 = vunpack.c.l.b16 %v158
  %v191 = vpack.c.b16 %v176, %v175
  %v192 = vpack.c.b16 %v178, %v177
  %v193 = vpack.c.b16 %v180, %v179
  %v194 = vpack.c.b16 %v182, %v181
  %v195 = vpack.c.b16 %v184, %v183
  %v196 = vpack.c.b16 %v186, %v185
  %v197 = vpack.c.b16 %v188, %v187
  %v198 = vpack.c.b16 %v190, %v189
  %207 = vmatprep.subr.bf16.mxu0 0
  %208 = vmatpush1.bf16.msra.mxu0 %v198
  %209 = vmatprep.subr.bf16.mxu0 0
  %210 = vmatpush1.bf16.msra.mxu0 %v197
  %211 = vmatprep.subr.bf16.mxu0 0
  %212 = vmatpush1.bf16.msra.mxu0 %v196
  %213 = vmatprep.subr.bf16.mxu0 0
  %214 = vmatpush1.bf16.msra.mxu0 %v195
  %215 = vmatprep.subr.bf16.mxu0 0
  %216 = vmatpush1.bf16.msra.mxu0 %v194
  %217 = vmatprep.subr.bf16.mxu0 0
  %218 = vmatpush1.bf16.msra.mxu0 %v193
  %219 = vmatprep.subr.bf16.mxu0 0
  %220 = vmatpush1.bf16.msra.mxu0 %v192
  %221 = vmatprep.subr.bf16.mxu0 0
  %222 = vmatpush1.bf16.msra.mxu0 %v191
  %223 = vmatprep.subr.bf16.mxu0 0
  %224 = vmatpush2.bf16.msra.mxu0 0
  %225 = vmatprep.subr.bf16.mxu0 0
  %226 = vmatpush2.bf16.msra.mxu0 0
  %227 = vmatprep.subr.bf16.mxu0 0
  %228 = vmatpush2.bf16.msra.mxu0 0
  %229 = vmatprep.subr.bf16.mxu0 0
  %230 = vmatpush2.bf16.msra.mxu0 0
  %231 = vmatprep.subr.bf16.mxu0 0
  %232 = vmatpush2.bf16.msra.mxu0 0
  %233 = vmatprep.subr.bf16.mxu0 0
  %234 = vmatpush2.bf16.msra.mxu0 0
  %235 = vmatprep.subr.bf16.mxu0 0
  %236 = vmatpush2.bf16.msra.mxu0 0
  %237 = vmatprep.subr.bf16.mxu0 0
  %238 = vmatpush2.bf16.msra.mxu0 0
  %239 = vmatprep.mubr.bf16.mxu0 0
  %240 = vmatmul.mubr.bf16.gmra.mxu0 %v135
  %v241 = vpop.f32.mrf.mxu0
  %v242 = vadd.f32 0.0, %v241
  %v243 = vpop.f32.mrf.mxu0
  %v244 = vpop.f32.mrf.mxu0
  %v245 = vadd.f32 0.0, %v244
  %v246 = vpop.f32.mrf.mxu0
  %247 = vmatprep.mubr.bf16.mxu0 0
  %248 = vmatmul.mubr.bf16.gmra.mxu0 %v136
  %v249 = vpop.f32.mrf.mxu0
  %v250 = vadd.f32 0.0, %v249
  %v251 = vpop.f32.mrf.mxu0
  %v252 = vpop.f32.mrf.mxu0
  %v253 = vadd.f32 0.0, %v252
  %v254 = vpop.f32.mrf.mxu0
  %255 = vmatprep.mubr.bf16.mxu0 0
  %256 = vmatmul.mubr.bf16.gmra.mxu0 %v137
  %v257 = vpop.f32.mrf.mxu0
  %v258 = vadd.f32 0.0, %v257
  %v259 = vpop.f32.mrf.mxu0
  %v260 = vpop.f32.mrf.mxu0
  %v261 = vadd.f32 0.0, %v260
  %v262 = vpop.f32.mrf.mxu0
  %263 = vmatprep.mubr.bf16.mxu0 0
  %264 = vmatmul.mubr.bf16.gmra.mxu0 %v138
  %v265 = vpop.f32.mrf.mxu0
  %v266 = vadd.f32 0.0, %v265
  %v267 = vpop.f32.mrf.mxu0
  %v268 = vpop.f32.mrf.mxu0
  %v269 = vadd.f32 0.0, %v268
  %v270 = vpop.f32.mrf.mxu0
  %271 = vmatprep.mubr.bf16.mxu0 0
  %272 = vmatmul.mubr.bf16.gmra.mxu0 %v139
  %v273 = vpop.f32.mrf.mxu0
  %v274 = vadd.f32 0.0, %v273
  %v275 = vpop.f32.mrf.mxu0
  %v276 = vpop.f32.mrf.mxu0
  %v277 = vadd.f32 0.0, %v276
  %v278 = vpop.f32.mrf.mxu0
  %279 = vmatprep.mubr.bf16.mxu0 0
  %280 = vmatmul.mubr.bf16.gmra.mxu0 %v140
  %v281 = vpop.f32.mrf.mxu0
  %v282 = vadd.f32 0.0, %v281
  %v283 = vpop.f32.mrf.mxu0
  %v284 = vpop.f32.mrf.mxu0
  %v285 = vadd.f32 0.0, %v284
  %v286 = vpop.f32.mrf.mxu0
  %287 = vmatprep.mubr.bf16.mxu0 0
  %288 = vmatmul.mubr.bf16.gmra.mxu0 %v141
  %v289 = vpop.f32.mrf.mxu0
  %v290 = vadd.f32 0.0, %v289
  %v291 = vpop.f32.mrf.mxu0
  %v292 = vpop.f32.mrf.mxu0
  %v293 = vadd.f32 0.0, %v292
  %v294 = vpop.f32.mrf.mxu0
  %295 = vmatprep.mubr.bf16.mxu0 0
  %296 = vmatmul.mubr.bf16.gmra.mxu0 %v142
  %v297 = vpop.f32.mrf.mxu0
  %v298 = vadd.f32 0.0, %v297
  %v299 = vpop.f32.mrf.mxu0
  %v300 = vpop.f32.mrf.mxu0
  %v301 = vadd.f32 0.0, %v300
  %v302 = vpop.f32.mrf.mxu0
  %303 = vdwg.mxu0
  %s304 = scalar_lea.vmem %s4, 64
  %v305 = vld [vmem:[%s304] sm:$0xf]
  %v306 = vld [vmem:[%s304 + $0x4] sm:$0xf]
  %v307 = vld [vmem:[%s304 + $0x8] sm:$0xf]
  %v308 = vld [vmem:[%s304 + $0xc] sm:$0xf]
  %v309 = vld [vmem:[%s304 + $0x10] sm:$0xf]
  %v310 = vld [vmem:[%s304 + $0x14] sm:$0xf]
  %v311 = vld [vmem:[%s304 + $0x18] sm:$0xf]
  %v312 = vld [vmem:[%s304 + $0x1c] sm:$0xf]
  %v313 = vld [vmem:[%s304 + $0x20] sm:$0xf]
  %v314 = vld [vmem:[%s304 + $0x24] sm:$0xf]
  %v315 = vld [vmem:[%s304 + $0x28] sm:$0xf]
  %v316 = vld [vmem:[%s304 + $0x2c] sm:$0xf]
  %v317 = vld [vmem:[%s304 + $0x30] sm:$0xf]
  %v318 = vld [vmem:[%s304 + $0x34] sm:$0xf]
  %v319 = vld [vmem:[%s304 + $0x38] sm:$0xf]
  %v320 = vld [vmem:[%s304 + $0x3c] sm:$0xf]
  %v337 = vunpack.c.l.b16 %v305
  %v338 = vunpack.c.l.b16 %v306
  %v339 = vunpack.c.l.b16 %v307
  %v340 = vunpack.c.l.b16 %v308
  %v341 = vunpack.c.l.b16 %v309
  %v342 = vunpack.c.l.b16 %v310
  %v343 = vunpack.c.l.b16 %v311
  %v344 = vunpack.c.l.b16 %v312
  %v345 = vunpack.c.l.b16 %v313
  %v346 = vunpack.c.l.b16 %v314
  %v347 = vunpack.c.l.b16 %v315
  %v348 = vunpack.c.l.b16 %v316
  %v349 = vunpack.c.l.b16 %v317
  %v350 = vunpack.c.l.b16 %v318
  %v351 = vunpack.c.l.b16 %v319
  %v352 = vunpack.c.l.b16 %v320
  %v353 = vpack.c.b16 %v338, %v337
  %v354 = vpack.c.b16 %v340, %v339
  %v355 = vpack.c.b16 %v342, %v341
  %v356 = vpack.c.b16 %v344, %v343
  %v357 = vpack.c.b16 %v346, %v345
  %v358 = vpack.c.b16 %v348, %v347
  %v359 = vpack.c.b16 %v350, %v349
  %v360 = vpack.c.b16 %v352, %v351
  %369 = vmatprep.subr.bf16.mxu0 0
  %370 = vmatpush1.bf16.msra.mxu0 %v360
  %371 = vmatprep.subr.bf16.mxu0 0
  %372 = vmatpush1.bf16.msra.mxu0 %v359
  %373 = vmatprep.subr.bf16.mxu0 0
  %374 = vmatpush1.bf16.msra.mxu0 %v358
  %375 = vmatprep.subr.bf16.mxu0 0
  %376 = vmatpush1.bf16.msra.mxu0 %v357
  %377 = vmatprep.subr.bf16.mxu0 0
  %378 = vmatpush1.bf16.msra.mxu0 %v356
  %379 = vmatprep.subr.bf16.mxu0 0
  %380 = vmatpush1.bf16.msra.mxu0 %v355
  %381 = vmatprep.subr.bf16.mxu0 0
  %382 = vmatpush1.bf16.msra.mxu0 %v354
  %383 = vmatprep.subr.bf16.mxu0 0
  %384 = vmatpush1.bf16.msra.mxu0 %v353
  %385 = vmatprep.subr.bf16.mxu0 0
  %386 = vmatpush2.bf16.msra.mxu0 0
  %387 = vmatprep.subr.bf16.mxu0 0
  %388 = vmatpush2.bf16.msra.mxu0 0
  %389 = vmatprep.subr.bf16.mxu0 0
  %390 = vmatpush2.bf16.msra.mxu0 0
  %391 = vmatprep.subr.bf16.mxu0 0
  %392 = vmatpush2.bf16.msra.mxu0 0
  %393 = vmatprep.subr.bf16.mxu0 0
  %394 = vmatpush2.bf16.msra.mxu0 0
  %395 = vmatprep.subr.bf16.mxu0 0
  %396 = vmatpush2.bf16.msra.mxu0 0
  %397 = vmatprep.subr.bf16.mxu0 0
  %398 = vmatpush2.bf16.msra.mxu0 0
  %399 = vmatprep.subr.bf16.mxu0 0
  %400 = vmatpush2.bf16.msra.mxu0 0
  %401 = vmatprep.mubr.bf16.mxu0 0
  %402 = vmatmul.mubr.bf16.gmra.mxu0 %v135
  %v403 = vpop.f32.mrf.mxu0
  %v404 = vadd.f32 0.0, %v403
  %v405 = vpop.f32.mrf.mxu0
  %v406 = vpop.f32.mrf.mxu0
  %v407 = vadd.f32 0.0, %v406
  %v408 = vpop.f32.mrf.mxu0
  %409 = vmatprep.mubr.bf16.mxu0 0
  %410 = vmatmul.mubr.bf16.gmra.mxu0 %v136
  %v411 = vpop.f32.mrf.mxu0
  %v412 = vadd.f32 0.0, %v411
  %v413 = vpop.f32.mrf.mxu0
  %v414 = vpop.f32.mrf.mxu0
  %v415 = vadd.f32 0.0, %v414
  %v416 = vpop.f32.mrf.mxu0
  %417 = vmatprep.mubr.bf16.mxu0 0
  %418 = vmatmul.mubr.bf16.gmra.mxu0 %v137
  %v419 = vpop.f32.mrf.mxu0
  %v420 = vadd.f32 0.0, %v419
  %v421 = vpop.f32.mrf.mxu0
  %v422 = vpop.f32.mrf.mxu0
  %v423 = vadd.f32 0.0, %v422
  %v424 = vpop.f32.mrf.mxu0
  %425 = vmatprep.mubr.bf16.mxu0 0
  %426 = vmatmul.mubr.bf16.gmra.mxu0 %v138
  %v427 = vpop.f32.mrf.mxu0
  %v428 = vadd.f32 0.0, %v427
  %v429 = vpop.f32.mrf.mxu0
  %v430 = vpop.f32.mrf.mxu0
  %v431 = vadd.f32 0.0, %v430
  %v432 = vpop.f32.mrf.mxu0
  %433 = vmatprep.mubr.bf16.mxu0 0
  %434 = vmatmul.mubr.bf16.gmra.mxu0 %v139
  %v435 = vpop.f32.mrf.mxu0
  %v436 = vadd.f32 0.0, %v435
  %v437 = vpop.f32.mrf.mxu0
  %v438 = vpop.f32.mrf.mxu0
  %v439 = vadd.f32 0.0, %v438
  %v440 = vpop.f32.mrf.mxu0
  %441 = vmatprep.mubr.bf16.mxu0 0
  %442 = vmatmul.mubr.bf16.gmra.mxu0 %v140
  %v443 = vpop.f32.mrf.mxu0
  %v444 = vadd.f32 0.0, %v443
  %v445 = vpop.f32.mrf.mxu0
  %v446 = vpop.f32.mrf.mxu0
  %v447 = vadd.f32 0.0, %v446
  %v448 = vpop.f32.mrf.mxu0
  %449 = vmatprep.mubr.bf16.mxu0 0
  %450 = vmatmul.mubr.bf16.gmra.mxu0 %v141
  %v451 = vpop.f32.mrf.mxu0
  %v452 = vadd.f32 0.0, %v451
  %v453 = vpop.f32.mrf.mxu0
  %v454 = vpop.f32.mrf.mxu0
  %v455 = vadd.f32 0.0, %v454
  %v456 = vpop.f32.mrf.mxu0
  %457 = vmatprep.mubr.bf16.mxu0 0
  %458 = vmatmul.mubr.bf16.gmra.mxu0 %v142
  %v459 = vpop.f32.mrf.mxu0
  %v460 = vadd.f32 0.0, %v459
  %v461 = vpop.f32.mrf.mxu0
  %v462 = vpop.f32.mrf.mxu0
  %v463 = vadd.f32 0.0, %v462
  %v464 = vpop.f32.mrf.mxu0
  %465 = vdwg.mxu0
  %s466 = scalar_lea.vmem %s4, 128
  %v467 = vld [vmem:[%s466] sm:$0xf]
  %v468 = vld [vmem:[%s466 + $0x4] sm:$0xf]
  %v469 = vld [vmem:[%s466 + $0x8] sm:$0xf]
  %v470 = vld [vmem:[%s466 + $0xc] sm:$0xf]
  %v471 = vld [vmem:[%s466 + $0x10] sm:$0xf]
  %v472 = vld [vmem:[%s466 + $0x14] sm:$0xf]
  %v473 = vld [vmem:[%s466 + $0x18] sm:$0xf]
  %v474 = vld [vmem:[%s466 + $0x1c] sm:$0xf]
  %v475 = vld [vmem:[%s466 + $0x20] sm:$0xf]
  %v476 = vld [vmem:[%s466 + $0x24] sm:$0xf]
  %v477 = vld [vmem:[%s466 + $0x28] sm:$0xf]
  %v478 = vld [vmem:[%s466 + $0x2c] sm:$0xf]
  %v479 = vld [vmem:[%s466 + $0x30] sm:$0xf]
  %v480 = vld [vmem:[%s466 + $0x34] sm:$0xf]
  %v481 = vld [vmem:[%s466 + $0x38] sm:$0xf]
  %v482 = vld [vmem:[%s466 + $0x3c] sm:$0xf]
  %v499 = vunpack.c.l.b16 %v467
  %v500 = vunpack.c.l.b16 %v468
  %v501 = vunpack.c.l.b16 %v469
  %v502 = vunpack.c.l.b16 %v470
  %v503 = vunpack.c.l.b16 %v471
  %v504 = vunpack.c.l.b16 %v472
  %v505 = vunpack.c.l.b16 %v473
  %v506 = vunpack.c.l.b16 %v474
  %v507 = vunpack.c.l.b16 %v475
  %v508 = vunpack.c.l.b16 %v476
  %v509 = vunpack.c.l.b16 %v477
  %v510 = vunpack.c.l.b16 %v478
  %v511 = vunpack.c.l.b16 %v479
  %v512 = vunpack.c.l.b16 %v480
  %v513 = vunpack.c.l.b16 %v481
  %v514 = vunpack.c.l.b16 %v482
  %v515 = vpack.c.b16 %v500, %v499
  %v516 = vpack.c.b16 %v502, %v501
  %v517 = vpack.c.b16 %v504, %v503
  %v518 = vpack.c.b16 %v506, %v505
  %v519 = vpack.c.b16 %v508, %v507
  %v520 = vpack.c.b16 %v510, %v509
  %v521 = vpack.c.b16 %v512, %v511
  %v522 = vpack.c.b16 %v514, %v513
  %531 = vmatprep.subr.bf16.mxu0 0
  %532 = vmatpush1.bf16.msra.mxu0 %v522
  %533 = vmatprep.subr.bf16.mxu0 0
  %534 = vmatpush1.bf16.msra.mxu0 %v521
  %535 = vmatprep.subr.bf16.mxu0 0
  %536 = vmatpush1.bf16.msra.mxu0 %v520
  %537 = vmatprep.subr.bf16.mxu0 0
  %538 = vmatpush1.bf16.msra.mxu0 %v519
  %539 = vmatprep.subr.bf16.mxu0 0
  %540 = vmatpush1.bf16.msra.mxu0 %v518
  %541 = vmatprep.subr.bf16.mxu0 0
  %542 = vmatpush1.bf16.msra.mxu0 %v517
  %543 = vmatprep.subr.bf16.mxu0 0
  %544 = vmatpush1.bf16.msra.mxu0 %v516
  %545 = vmatprep.subr.bf16.mxu0 0
  %546 = vmatpush1.bf16.msra.mxu0 %v515
  %547 = vmatprep.subr.bf16.mxu0 0
  %548 = vmatpush2.bf16.msra.mxu0 0
  %549 = vmatprep.subr.bf16.mxu0 0
  %550 = vmatpush2.bf16.msra.mxu0 0
  %551 = vmatprep.subr.bf16.mxu0 0
  %552 = vmatpush2.bf16.msra.mxu0 0
  %553 = vmatprep.subr.bf16.mxu0 0
  %554 = vmatpush2.bf16.msra.mxu0 0
  %555 = vmatprep.subr.bf16.mxu0 0
  %556 = vmatpush2.bf16.msra.mxu0 0
  %557 = vmatprep.subr.bf16.mxu0 0
  %558 = vmatpush2.bf16.msra.mxu0 0
  %559 = vmatprep.subr.bf16.mxu0 0
  %560 = vmatpush2.bf16.msra.mxu0 0
  %561 = vmatprep.subr.bf16.mxu0 0
  %562 = vmatpush2.bf16.msra.mxu0 0
  %563 = vmatprep.mubr.bf16.mxu0 0
  %564 = vmatmul.mubr.bf16.gmra.mxu0 %v135
  %v565 = vpop.f32.mrf.mxu0
  %v566 = vadd.f32 0.0, %v565
  %v567 = vpop.f32.mrf.mxu0
  %v568 = vpop.f32.mrf.mxu0
  %v569 = vadd.f32 0.0, %v568
  %v570 = vpop.f32.mrf.mxu0
  %571 = vmatprep.mubr.bf16.mxu0 0
  %572 = vmatmul.mubr.bf16.gmra.mxu0 %v136
  %v573 = vpop.f32.mrf.mxu0
  %v574 = vadd.f32 0.0, %v573
  %v575 = vpop.f32.mrf.mxu0
  %v576 = vpop.f32.mrf.mxu0
  %v577 = vadd.f32 0.0, %v576
  %v578 = vpop.f32.mrf.mxu0
  %579 = vmatprep.mubr.bf16.mxu0 0
  %580 = vmatmul.mubr.bf16.gmra.mxu0 %v137
  %v581 = vpop.f32.mrf.mxu0
  %v582 = vadd.f32 0.0, %v581
  %v583 = vpop.f32.mrf.mxu0
  %v584 = vpop.f32.mrf.mxu0
  %v585 = vadd.f32 0.0, %v584
  %v586 = vpop.f32.mrf.mxu0
  %587 = vmatprep.mubr.bf16.mxu0 0
  %588 = vmatmul.mubr.bf16.gmra.mxu0 %v138
  %v589 = vpop.f32.mrf.mxu0
  %v590 = vadd.f32 0.0, %v589
  %v591 = vpop.f32.mrf.mxu0
  %v592 = vpop.f32.mrf.mxu0
  %v593 = vadd.f32 0.0, %v592
  %v594 = vpop.f32.mrf.mxu0
  %595 = vmatprep.mubr.bf16.mxu0 0
  %596 = vmatmul.mubr.bf16.gmra.mxu0 %v139
  %v597 = vpop.f32.mrf.mxu0
  %v598 = vadd.f32 0.0, %v597
  %v599 = vpop.f32.mrf.mxu0
  %v600 = vpop.f32.mrf.mxu0
  %v601 = vadd.f32 0.0, %v600
  %v602 = vpop.f32.mrf.mxu0
  %603 = vmatprep.mubr.bf16.mxu0 0
  %604 = vmatmul.mubr.bf16.gmra.mxu0 %v140
  %v605 = vpop.f32.mrf.mxu0
  %v606 = vadd.f32 0.0, %v605
  %v607 = vpop.f32.mrf.mxu0
  %v608 = vpop.f32.mrf.mxu0
  %v609 = vadd.f32 0.0, %v608
  %v610 = vpop.f32.mrf.mxu0
  %611 = vmatprep.mubr.bf16.mxu0 0
  %612 = vmatmul.mubr.bf16.gmra.mxu0 %v141
  %v613 = vpop.f32.mrf.mxu0
  %v614 = vadd.f32 0.0, %v613
  %v615 = vpop.f32.mrf.mxu0
  %v616 = vpop.f32.mrf.mxu0
  %v617 = vadd.f32 0.0, %v616
  %v618 = vpop.f32.mrf.mxu0
  %619 = vmatprep.mubr.bf16.mxu0 0
  %620 = vmatmul.mubr.bf16.gmra.mxu0 %v142
  %v621 = vpop.f32.mrf.mxu0
  %v622 = vadd.f32 0.0, %v621
  %v623 = vpop.f32.mrf.mxu0
  %v624 = vpop.f32.mrf.mxu0
  %v625 = vadd.f32 0.0, %v624
  %v626 = vpop.f32.mrf.mxu0
  %627 = vdwg.mxu0
  %s628 = scalar_lea.vmem %s4, 192
  %v629 = vld [vmem:[%s628] sm:$0xf]
  %v630 = vld [vmem:[%s628 + $0x4] sm:$0xf]
  %v631 = vld [vmem:[%s628 + $0x8] sm:$0xf]
  %v632 = vld [vmem:[%s628 + $0xc] sm:$0xf]
  %v633 = vld [vmem:[%s628 + $0x10] sm:$0xf]
  %v634 = vld [vmem:[%s628 + $0x14] sm:$0xf]
  %v635 = vld [vmem:[%s628 + $0x18] sm:$0xf]
  %v636 = vld [vmem:[%s628 + $0x1c] sm:$0xf]
  %v637 = vld [vmem:[%s628 + $0x20] sm:$0xf]
  %v638 = vld [vmem:[%s628 + $0x24] sm:$0xf]
  %v639 = vld [vmem:[%s628 + $0x28] sm:$0xf]
  %v640 = vld [vmem:[%s628 + $0x2c] sm:$0xf]
  %v641 = vld [vmem:[%s628 + $0x30] sm:$0xf]
  %v642 = vld [vmem:[%s628 + $0x34] sm:$0xf]
  %v643 = vld [vmem:[%s628 + $0x38] sm:$0xf]
  %v644 = vld [vmem:[%s628 + $0x3c] sm:$0xf]
  %v661 = vunpack.c.l.b16 %v629
  %v662 = vunpack.c.l.b16 %v630
  %v663 = vunpack.c.l.b16 %v631
  %v664 = vunpack.c.l.b16 %v632
  %v665 = vunpack.c.l.b16 %v633
  %v666 = vunpack.c.l.b16 %v634
  %v667 = vunpack.c.l.b16 %v635
  %v668 = vunpack.c.l.b16 %v636
  %v669 = vunpack.c.l.b16 %v637
  %v670 = vunpack.c.l.b16 %v638
  %v671 = vunpack.c.l.b16 %v639
  %v672 = vunpack.c.l.b16 %v640
  %v673 = vunpack.c.l.b16 %v641
  %v674 = vunpack.c.l.b16 %v642
  %v675 = vunpack.c.l.b16 %v643
  %v676 = vunpack.c.l.b16 %v644
  %v677 = vpack.c.b16 %v662, %v661
  %v678 = vpack.c.b16 %v664, %v663
  %v679 = vpack.c.b16 %v666, %v665
  %v680 = vpack.c.b16 %v668, %v667
  %v681 = vpack.c.b16 %v670, %v669
  %v682 = vpack.c.b16 %v672, %v671
  %v683 = vpack.c.b16 %v674, %v673
  %v684 = vpack.c.b16 %v676, %v675
  %693 = vmatprep.subr.bf16.mxu0 0
  %694 = vmatpush1.bf16.msra.mxu0 %v684
  %695 = vmatprep.subr.bf16.mxu0 0
  %696 = vmatpush1.bf16.msra.mxu0 %v683
  %697 = vmatprep.subr.bf16.mxu0 0
  %698 = vmatpush1.bf16.msra.mxu0 %v682
  %699 = vmatprep.subr.bf16.mxu0 0
  %700 = vmatpush1.bf16.msra.mxu0 %v681
  %701 = vmatprep.subr.bf16.mxu0 0
  %702 = vmatpush1.bf16.msra.mxu0 %v680
  %703 = vmatprep.subr.bf16.mxu0 0
  %704 = vmatpush1.bf16.msra.mxu0 %v679
  %705 = vmatprep.subr.bf16.mxu0 0
  %706 = vmatpush1.bf16.msra.mxu0 %v678
  %707 = vmatprep.subr.bf16.mxu0 0
  %708 = vmatpush1.bf16.msra.mxu0 %v677
  %709 = vmatprep.subr.bf16.mxu0 0
  %710 = vmatpush2.bf16.msra.mxu0 0
  %711 = vmatprep.subr.bf16.mxu0 0
  %712 = vmatpush2.bf16.msra.mxu0 0
  %713 = vmatprep.subr.bf16.mxu0 0
  %714 = vmatpush2.bf16.msra.mxu0 0
  %715 = vmatprep.subr.bf16.mxu0 0
  %716 = vmatpush2.bf16.msra.mxu0 0
  %717 = vmatprep.subr.bf16.mxu0 0
  %718 = vmatpush2.bf16.msra.mxu0 0
  %719 = vmatprep.subr.bf16.mxu0 0
  %720 = vmatpush2.bf16.msra.mxu0 0
  %721 = vmatprep.subr.bf16.mxu0 0
  %722 = vmatpush2.bf16.msra.mxu0 0
  %723 = vmatprep.subr.bf16.mxu0 0
  %724 = vmatpush2.bf16.msra.mxu0 0
  %725 = vmatprep.mubr.bf16.mxu0 0
  %726 = vmatmul.mubr.bf16.gmra.mxu0 %v135
  %v727 = vpop.f32.mrf.mxu0
  %v728 = vadd.f32 0.0, %v727
  %v729 = vpop.f32.mrf.mxu0
  %v730 = vpop.f32.mrf.mxu0
  %v731 = vadd.f32 0.0, %v730
  %v732 = vpop.f32.mrf.mxu0
  %733 = vmatprep.mubr.bf16.mxu0 0
  %734 = vmatmul.mubr.bf16.gmra.mxu0 %v136
  %v735 = vpop.f32.mrf.mxu0
  %v736 = vadd.f32 0.0, %v735
  %v737 = vpop.f32.mrf.mxu0
  %v738 = vpop.f32.mrf.mxu0
  %v739 = vadd.f32 0.0, %v738
  %v740 = vpop.f32.mrf.mxu0
  %741 = vmatprep.mubr.bf16.mxu0 0
  %742 = vmatmul.mubr.bf16.gmra.mxu0 %v137
  %v743 = vpop.f32.mrf.mxu0
  %v744 = vadd.f32 0.0, %v743
  %v745 = vpop.f32.mrf.mxu0
  %v746 = vpop.f32.mrf.mxu0
  %v747 = vadd.f32 0.0, %v746
  %v748 = vpop.f32.mrf.mxu0
  %749 = vmatprep.mubr.bf16.mxu0 0
  %750 = vmatmul.mubr.bf16.gmra.mxu0 %v138
  %v751 = vpop.f32.mrf.mxu0
  %v752 = vadd.f32 0.0, %v751
  %v753 = vpop.f32.mrf.mxu0
  %v754 = vpop.f32.mrf.mxu0
  %v755 = vadd.f32 0.0, %v754
  %v756 = vpop.f32.mrf.mxu0
  %757 = vmatprep.mubr.bf16.mxu0 0
  %758 = vmatmul.mubr.bf16.gmra.mxu0 %v139
  %v759 = vpop.f32.mrf.mxu0
  %v760 = vadd.f32 0.0, %v759
  %v761 = vpop.f32.mrf.mxu0
  %v762 = vpop.f32.mrf.mxu0
  %v763 = vadd.f32 0.0, %v762
  %v764 = vpop.f32.mrf.mxu0
  %765 = vmatprep.mubr.bf16.mxu0 0
  %766 = vmatmul.mubr.bf16.gmra.mxu0 %v140
  %v767 = vpop.f32.mrf.mxu0
  %v768 = vadd.f32 0.0, %v767
  %v769 = vpop.f32.mrf.mxu0
  %v770 = vpop.f32.mrf.mxu0
  %v771 = vadd.f32 0.0, %v770
  %v772 = vpop.f32.mrf.mxu0
  %773 = vmatprep.mubr.bf16.mxu0 0
  %774 = vmatmul.mubr.bf16.gmra.mxu0 %v141
  %v775 = vpop.f32.mrf.mxu0
  %v776 = vadd.f32 0.0, %v775
  %v777 = vpop.f32.mrf.mxu0
  %v778 = vpop.f32.mrf.mxu0
  %v779 = vadd.f32 0.0, %v778
  %v780 = vpop.f32.mrf.mxu0
  %781 = vmatprep.mubr.bf16.mxu0 0
  %782 = vmatmul.mubr.bf16.gmra.mxu0 %v142
  %v783 = vpop.f32.mrf.mxu0
  %v784 = vadd.f32 0.0, %v783
  %v785 = vpop.f32.mrf.mxu0
  %v786 = vpop.f32.mrf.mxu0
  %v787 = vadd.f32 0.0, %v786
  %v788 = vpop.f32.mrf.mxu0
  %789 = vdwg.mxu0
  %v790 = vld [vmem:[%s2] sm:$0xf]
  %v791 = vld [vmem:[%s2 + $0x4] sm:$0xf]
  %v792 = vld [vmem:[%s2 + $0x8] sm:$0xf]
  %v793 = vld [vmem:[%s2 + $0xc] sm:$0xf]
  %v794 = vld [vmem:[%s2 + $0x10] sm:$0xf]
  %v795 = vld [vmem:[%s2 + $0x14] sm:$0xf]
  %v796 = vld [vmem:[%s2 + $0x18] sm:$0xf]
  %v797 = vld [vmem:[%s2 + $0x1c] sm:$0xf]
  %v798 = vld [vmem:[%s2 + $0x20] sm:$0xf]
  %v799 = vld [vmem:[%s2 + $0x24] sm:$0xf]
  %v800 = vld [vmem:[%s2 + $0x28] sm:$0xf]
  %v801 = vld [vmem:[%s2 + $0x2c] sm:$0xf]
  %v802 = vld [vmem:[%s2 + $0x30] sm:$0xf]
  %v803 = vld [vmem:[%s2 + $0x34] sm:$0xf]
  %v804 = vld [vmem:[%s2 + $0x38] sm:$0xf]
  %v805 = vld [vmem:[%s2 + $0x3c] sm:$0xf]
  %v806 = vunpack.c.l.bf16 %v790
  %v807 = vunpack.c.l.bf16 %v791
  %v808 = vunpack.c.l.bf16 %v792
  %v809 = vunpack.c.l.bf16 %v793
  %v810 = vunpack.c.l.bf16 %v794
  %v811 = vunpack.c.l.bf16 %v795
  %v812 = vunpack.c.l.bf16 %v796
  %v813 = vunpack.c.l.bf16 %v797
  %v814 = vunpack.c.l.bf16 %v798
  %v815 = vunpack.c.l.bf16 %v799
  %v816 = vunpack.c.l.bf16 %v800
  %v817 = vunpack.c.l.bf16 %v801
  %v818 = vunpack.c.l.bf16 %v802
  %v819 = vunpack.c.l.bf16 %v803
  %v820 = vunpack.c.l.bf16 %v804
  %v821 = vunpack.c.l.bf16 %v805
  %s822 = scalar_lea.vmem %s2, 64
  %v823 = vld [vmem:[%s822] sm:$0xf]
  %v824 = vld [vmem:[%s822 + $0x4] sm:$0xf]
  %v825 = vld [vmem:[%s822 + $0x8] sm:$0xf]
  %v826 = vld [vmem:[%s822 + $0xc] sm:$0xf]
  %v827 = vld [vmem:[%s822 + $0x10] sm:$0xf]
  %v828 = vld [vmem:[%s822 + $0x14] sm:$0xf]
  %v829 = vld [vmem:[%s822 + $0x18] sm:$0xf]
  %v830 = vld [vmem:[%s822 + $0x1c] sm:$0xf]
  %v831 = vld [vmem:[%s822 + $0x20] sm:$0xf]
  %v832 = vld [vmem:[%s822 + $0x24] sm:$0xf]
  %v833 = vld [vmem:[%s822 + $0x28] sm:$0xf]
  %v834 = vld [vmem:[%s822 + $0x2c] sm:$0xf]
  %v835 = vld [vmem:[%s822 + $0x30] sm:$0xf]
  %v836 = vld [vmem:[%s822 + $0x34] sm:$0xf]
  %v837 = vld [vmem:[%s822 + $0x38] sm:$0xf]
  %v838 = vld [vmem:[%s822 + $0x3c] sm:$0xf]
  %v839 = vunpack.c.l.bf16 %v823
  %v840 = vunpack.c.l.bf16 %v824
  %v841 = vunpack.c.l.bf16 %v825
  %v842 = vunpack.c.l.bf16 %v826
  %v843 = vunpack.c.l.bf16 %v827
  %v844 = vunpack.c.l.bf16 %v828
  %v845 = vunpack.c.l.bf16 %v829
  %v846 = vunpack.c.l.bf16 %v830
  %v847 = vunpack.c.l.bf16 %v831
  %v848 = vunpack.c.l.bf16 %v832
  %v849 = vunpack.c.l.bf16 %v833
  %v850 = vunpack.c.l.bf16 %v834
  %v851 = vunpack.c.l.bf16 %v835
  %v852 = vunpack.c.l.bf16 %v836
  %v853 = vunpack.c.l.bf16 %v837
  %v854 = vunpack.c.l.bf16 %v838
  %s855 = scalar_lea.vmem %s2, 128
  %v856 = vld [vmem:[%s855] sm:$0xf]
  %v857 = vld [vmem:[%s855 + $0x4] sm:$0xf]
  %v858 = vld [vmem:[%s855 + $0x8] sm:$0xf]
  %v859 = vld [vmem:[%s855 + $0xc] sm:$0xf]
  %v860 = vld [vmem:[%s855 + $0x10] sm:$0xf]
  %v861 = vld [vmem:[%s855 + $0x14] sm:$0xf]
  %v862 = vld [vmem:[%s855 + $0x18] sm:$0xf]
  %v863 = vld [vmem:[%s855 + $0x1c] sm:$0xf]
  %v864 = vld [vmem:[%s855 + $0x20] sm:$0xf]
  %v865 = vld [vmem:[%s855 + $0x24] sm:$0xf]
  %v866 = vld [vmem:[%s855 + $0x28] sm:$0xf]
  %v867 = vld [vmem:[%s855 + $0x2c] sm:$0xf]
  %v868 = vld [vmem:[%s855 + $0x30] sm:$0xf]
  %v869 = vld [vmem:[%s855 + $0x34] sm:$0xf]
  %v870 = vld [vmem:[%s855 + $0x38] sm:$0xf]
  %v871 = vld [vmem:[%s855 + $0x3c] sm:$0xf]
  %v872 = vunpack.c.l.bf16 %v856
  %v873 = vunpack.c.l.bf16 %v857
  %v874 = vunpack.c.l.bf16 %v858
  %v875 = vunpack.c.l.bf16 %v859
  %v876 = vunpack.c.l.bf16 %v860
  %v877 = vunpack.c.l.bf16 %v861
  %v878 = vunpack.c.l.bf16 %v862
  %v879 = vunpack.c.l.bf16 %v863
  %v880 = vunpack.c.l.bf16 %v864
  %v881 = vunpack.c.l.bf16 %v865
  %v882 = vunpack.c.l.bf16 %v866
  %v883 = vunpack.c.l.bf16 %v867
  %v884 = vunpack.c.l.bf16 %v868
  %v885 = vunpack.c.l.bf16 %v869
  %v886 = vunpack.c.l.bf16 %v870
  %v887 = vunpack.c.l.bf16 %v871
  %s888 = scalar_lea.vmem %s2, 192
  %v889 = vld [vmem:[%s888] sm:$0xf]
  %v890 = vld [vmem:[%s888 + $0x4] sm:$0xf]
  %v891 = vld [vmem:[%s888 + $0x8] sm:$0xf]
  %v892 = vld [vmem:[%s888 + $0xc] sm:$0xf]
  %v893 = vld [vmem:[%s888 + $0x10] sm:$0xf]
  %v894 = vld [vmem:[%s888 + $0x14] sm:$0xf]
  %v895 = vld [vmem:[%s888 + $0x18] sm:$0xf]
  %v896 = vld [vmem:[%s888 + $0x1c] sm:$0xf]
  %v897 = vld [vmem:[%s888 + $0x20] sm:$0xf]
  %v898 = vld [vmem:[%s888 + $0x24] sm:$0xf]
  %v899 = vld [vmem:[%s888 + $0x28] sm:$0xf]
  %v900 = vld [vmem:[%s888 + $0x2c] sm:$0xf]
  %v901 = vld [vmem:[%s888 + $0x30] sm:$0xf]
  %v902 = vld [vmem:[%s888 + $0x34] sm:$0xf]
  %v903 = vld [vmem:[%s888 + $0x38] sm:$0xf]
  %v904 = vld [vmem:[%s888 + $0x3c] sm:$0xf]
  %v905 = vunpack.c.l.bf16 %v889
  %v906 = vunpack.c.l.bf16 %v890
  %v907 = vunpack.c.l.bf16 %v891
  %v908 = vunpack.c.l.bf16 %v892
  %v909 = vunpack.c.l.bf16 %v893
  %v910 = vunpack.c.l.bf16 %v894
  %v911 = vunpack.c.l.bf16 %v895
  %v912 = vunpack.c.l.bf16 %v896
  %v913 = vunpack.c.l.bf16 %v897
  %v914 = vunpack.c.l.bf16 %v898
  %v915 = vunpack.c.l.bf16 %v899
  %v916 = vunpack.c.l.bf16 %v900
  %v917 = vunpack.c.l.bf16 %v901
  %v918 = vunpack.c.l.bf16 %v902
  %v919 = vunpack.c.l.bf16 %v903
  %v920 = vunpack.c.l.bf16 %v904
  %v921 = vmul.f32 %v806, %v242
  %v922 = vmul.f32 %v807, %v245
  %v923 = vmul.f32 %v808, %v250
  %v924 = vmul.f32 %v809, %v253
  %v925 = vmul.f32 %v810, %v258
  %v926 = vmul.f32 %v811, %v261
  %v927 = vmul.f32 %v812, %v266
  %v928 = vmul.f32 %v813, %v269
  %v929 = vmul.f32 %v814, %v274
  %v930 = vmul.f32 %v815, %v277
  %v931 = vmul.f32 %v816, %v282
  %v932 = vmul.f32 %v817, %v285
  %v933 = vmul.f32 %v818, %v290
  %v934 = vmul.f32 %v819, %v293
  %v935 = vmul.f32 %v820, %v298
  %v936 = vmul.f32 %v821, %v301
  %v937 = vmul.f32 %v839, %v404
  %v938 = vmul.f32 %v840, %v407
  %v939 = vmul.f32 %v841, %v412
  %v940 = vmul.f32 %v842, %v415
  %v941 = vmul.f32 %v843, %v420
  %v942 = vmul.f32 %v844, %v423
  %v943 = vmul.f32 %v845, %v428
  %v944 = vmul.f32 %v846, %v431
  %v945 = vmul.f32 %v847, %v436
  %v946 = vmul.f32 %v848, %v439
  %v947 = vmul.f32 %v849, %v444
  %v948 = vmul.f32 %v850, %v447
  %v949 = vmul.f32 %v851, %v452
  %v950 = vmul.f32 %v852, %v455
  %v951 = vmul.f32 %v853, %v460
  %v952 = vmul.f32 %v854, %v463
  %v953 = vsub.f32 %v921, %v937
  %v954 = vsub.f32 %v922, %v938
  %v955 = vsub.f32 %v923, %v939
  %v956 = vsub.f32 %v924, %v940
  %v957 = vsub.f32 %v925, %v941
  %v958 = vsub.f32 %v926, %v942
  %v959 = vsub.f32 %v927, %v943
  %v960 = vsub.f32 %v928, %v944
  %v961 = vsub.f32 %v929, %v945
  %v962 = vsub.f32 %v930, %v946
  %v963 = vsub.f32 %v931, %v947
  %v964 = vsub.f32 %v932, %v948
  %v965 = vsub.f32 %v933, %v949
  %v966 = vsub.f32 %v934, %v950
  %v967 = vsub.f32 %v935, %v951
  %v968 = vsub.f32 %v936, %v952
  %v969 = vmul.f32 %v872, %v566
  %v970 = vmul.f32 %v873, %v569
  %v971 = vmul.f32 %v874, %v574
  %v972 = vmul.f32 %v875, %v577
  %v973 = vmul.f32 %v876, %v582
  %v974 = vmul.f32 %v877, %v585
  %v975 = vmul.f32 %v878, %v590
  %v976 = vmul.f32 %v879, %v593
  %v977 = vmul.f32 %v880, %v598
  %v978 = vmul.f32 %v881, %v601
  %v979 = vmul.f32 %v882, %v606
  %v980 = vmul.f32 %v883, %v609
  %v981 = vmul.f32 %v884, %v614
  %v982 = vmul.f32 %v885, %v617
  %v983 = vmul.f32 %v886, %v622
  %v984 = vmul.f32 %v887, %v625
  %v985 = vsub.f32 %v953, %v969
  %v986 = vsub.f32 %v954, %v970
  %v987 = vsub.f32 %v955, %v971
  %v988 = vsub.f32 %v956, %v972
  %v989 = vsub.f32 %v957, %v973
  %v990 = vsub.f32 %v958, %v974
  %v991 = vsub.f32 %v959, %v975
  %v992 = vsub.f32 %v960, %v976
  %v993 = vsub.f32 %v961, %v977
  %v994 = vsub.f32 %v962, %v978
  %v995 = vsub.f32 %v963, %v979
  %v996 = vsub.f32 %v964, %v980
  %v997 = vsub.f32 %v965, %v981
  %v998 = vsub.f32 %v966, %v982
  %v999 = vsub.f32 %v967, %v983
  %v1000 = vsub.f32 %v968, %v984
  %v1001 = vmul.f32 %v905, %v728
  %v1002 = vmul.f32 %v906, %v731
  %v1003 = vmul.f32 %v907, %v736
  %v1004 = vmul.f32 %v908, %v739
  %v1005 = vmul.f32 %v909, %v744
  %v1006 = vmul.f32 %v910, %v747
  %v1007 = vmul.f32 %v911, %v752
  %v1008 = vmul.f32 %v912, %v755
  %v1009 = vmul.f32 %v913, %v760
  %v1010 = vmul.f32 %v914, %v763
  %v1011 = vmul.f32 %v915, %v768
  %v1012 = vmul.f32 %v916, %v771
  %v1013 = vmul.f32 %v917, %v776
  %v1014 = vmul.f32 %v918, %v779
  %v1015 = vmul.f32 %v919, %v784
  %v1016 = vmul.f32 %v920, %v787
  %v1017 = vsub.f32 %v985, %v1001
  %v1018 = vsub.f32 %v986, %v1002
  %v1019 = vsub.f32 %v987, %v1003
  %v1020 = vsub.f32 %v988, %v1004
  %v1021 = vsub.f32 %v989, %v1005
  %v1022 = vsub.f32 %v990, %v1006
  %v1023 = vsub.f32 %v991, %v1007
  %v1024 = vsub.f32 %v992, %v1008
  %v1025 = vsub.f32 %v993, %v1009
  %v1026 = vsub.f32 %v994, %v1010
  %v1027 = vsub.f32 %v995, %v1011
  %v1028 = vsub.f32 %v996, %v1012
  %v1029 = vsub.f32 %v997, %v1013
  %v1030 = vsub.f32 %v998, %v1014
  %v1031 = vsub.f32 %v999, %v1015
  %v1032 = vsub.f32 %v1000, %v1016
  %v1033 = vld [vmem:[%s3] sm:$0xf]
  %v1034 = vld [vmem:[%s3 + $0x4] sm:$0xf]
  %v1035 = vld [vmem:[%s3 + $0x8] sm:$0xf]
  %v1036 = vld [vmem:[%s3 + $0xc] sm:$0xf]
  %v1037 = vld [vmem:[%s3 + $0x10] sm:$0xf]
  %v1038 = vld [vmem:[%s3 + $0x14] sm:$0xf]
  %v1039 = vld [vmem:[%s3 + $0x18] sm:$0xf]
  %v1040 = vld [vmem:[%s3 + $0x1c] sm:$0xf]
  %v1041 = vld [vmem:[%s3 + $0x20] sm:$0xf]
  %v1042 = vld [vmem:[%s3 + $0x24] sm:$0xf]
  %v1043 = vld [vmem:[%s3 + $0x28] sm:$0xf]
  %v1044 = vld [vmem:[%s3 + $0x2c] sm:$0xf]
  %v1045 = vld [vmem:[%s3 + $0x30] sm:$0xf]
  %v1046 = vld [vmem:[%s3 + $0x34] sm:$0xf]
  %v1047 = vld [vmem:[%s3 + $0x38] sm:$0xf]
  %v1048 = vld [vmem:[%s3 + $0x3c] sm:$0xf]
  %v1049 = vunpack.c.l.bf16 %v1033
  %v1050 = vunpack.c.l.bf16 %v1034
  %v1051 = vunpack.c.l.bf16 %v1035
  %v1052 = vunpack.c.l.bf16 %v1036
  %v1053 = vunpack.c.l.bf16 %v1037
  %v1054 = vunpack.c.l.bf16 %v1038
  %v1055 = vunpack.c.l.bf16 %v1039
  %v1056 = vunpack.c.l.bf16 %v1040
  %v1057 = vunpack.c.l.bf16 %v1041
  %v1058 = vunpack.c.l.bf16 %v1042
  %v1059 = vunpack.c.l.bf16 %v1043
  %v1060 = vunpack.c.l.bf16 %v1044
  %v1061 = vunpack.c.l.bf16 %v1045
  %v1062 = vunpack.c.l.bf16 %v1046
  %v1063 = vunpack.c.l.bf16 %v1047
  %v1064 = vunpack.c.l.bf16 %v1048
  %v1065 = vmul.f32 %v1017, %v1049
  %v1066 = vmul.f32 %v1018, %v1050
  %v1067 = vmul.f32 %v1019, %v1051
  %v1068 = vmul.f32 %v1020, %v1052
  %v1069 = vmul.f32 %v1021, %v1053
  %v1070 = vmul.f32 %v1022, %v1054
  %v1071 = vmul.f32 %v1023, %v1055
  %v1072 = vmul.f32 %v1024, %v1056
  %v1073 = vmul.f32 %v1025, %v1057
  %v1074 = vmul.f32 %v1026, %v1058
  %v1075 = vmul.f32 %v1027, %v1059
  %v1076 = vmul.f32 %v1028, %v1060
  %v1077 = vmul.f32 %v1029, %v1061
  %v1078 = vmul.f32 %v1030, %v1062
  %v1079 = vmul.f32 %v1031, %v1063
  %v1080 = vmul.f32 %v1032, %v1064
  %v1081 = vmul.f32 %v806, %v404
  %v1082 = vmul.f32 %v807, %v407
  %v1083 = vmul.f32 %v808, %v412
  %v1084 = vmul.f32 %v809, %v415
  %v1085 = vmul.f32 %v810, %v420
  %v1086 = vmul.f32 %v811, %v423
  %v1087 = vmul.f32 %v812, %v428
  %v1088 = vmul.f32 %v813, %v431
  %v1089 = vmul.f32 %v814, %v436
  %v1090 = vmul.f32 %v815, %v439
  %v1091 = vmul.f32 %v816, %v444
  %v1092 = vmul.f32 %v817, %v447
  %v1093 = vmul.f32 %v818, %v452
  %v1094 = vmul.f32 %v819, %v455
  %v1095 = vmul.f32 %v820, %v460
  %v1096 = vmul.f32 %v821, %v463
  %v1097 = vmul.f32 %v839, %v242
  %v1098 = vmul.f32 %v840, %v245
  %v1099 = vmul.f32 %v841, %v250
  %v1100 = vmul.f32 %v842, %v253
  %v1101 = vmul.f32 %v843, %v258
  %v1102 = vmul.f32 %v844, %v261
  %v1103 = vmul.f32 %v845, %v266
  %v1104 = vmul.f32 %v846, %v269
  %v1105 = vmul.f32 %v847, %v274
  %v1106 = vmul.f32 %v848, %v277
  %v1107 = vmul.f32 %v849, %v282
  %v1108 = vmul.f32 %v850, %v285
  %v1109 = vmul.f32 %v851, %v290
  %v1110 = vmul.f32 %v852, %v293
  %v1111 = vmul.f32 %v853, %v298
  %v1112 = vmul.f32 %v854, %v301
  %v1113 = vadd.f32 %v1081, %v1097
  %v1114 = vadd.f32 %v1082, %v1098
  %v1115 = vadd.f32 %v1083, %v1099
  %v1116 = vadd.f32 %v1084, %v1100
  %v1117 = vadd.f32 %v1085, %v1101
  %v1118 = vadd.f32 %v1086, %v1102
  %v1119 = vadd.f32 %v1087, %v1103
  %v1120 = vadd.f32 %v1088, %v1104
  %v1121 = vadd.f32 %v1089, %v1105
  %v1122 = vadd.f32 %v1090, %v1106
  %v1123 = vadd.f32 %v1091, %v1107
  %v1124 = vadd.f32 %v1092, %v1108
  %v1125 = vadd.f32 %v1093, %v1109
  %v1126 = vadd.f32 %v1094, %v1110
  %v1127 = vadd.f32 %v1095, %v1111
  %v1128 = vadd.f32 %v1096, %v1112
  %v1129 = vmul.f32 %v872, %v728
  %v1130 = vmul.f32 %v873, %v731
  %v1131 = vmul.f32 %v874, %v736
  %v1132 = vmul.f32 %v875, %v739
  %v1133 = vmul.f32 %v876, %v744
  %v1134 = vmul.f32 %v877, %v747
  %v1135 = vmul.f32 %v878, %v752
  %v1136 = vmul.f32 %v879, %v755
  %v1137 = vmul.f32 %v880, %v760
  %v1138 = vmul.f32 %v881, %v763
  %v1139 = vmul.f32 %v882, %v768
  %v1140 = vmul.f32 %v883, %v771
  %v1141 = vmul.f32 %v884, %v776
  %v1142 = vmul.f32 %v885, %v779
  %v1143 = vmul.f32 %v886, %v784
  %v1144 = vmul.f32 %v887, %v787
  %v1145 = vadd.f32 %v1113, %v1129
  %v1146 = vadd.f32 %v1114, %v1130
  %v1147 = vadd.f32 %v1115, %v1131
  %v1148 = vadd.f32 %v1116, %v1132
  %v1149 = vadd.f32 %v1117, %v1133
  %v1150 = vadd.f32 %v1118, %v1134
  %v1151 = vadd.f32 %v1119, %v1135
  %v1152 = vadd.f32 %v1120, %v1136
  %v1153 = vadd.f32 %v1121, %v1137
  %v1154 = vadd.f32 %v1122, %v1138
  %v1155 = vadd.f32 %v1123, %v1139
  %v1156 = vadd.f32 %v1124, %v1140
  %v1157 = vadd.f32 %v1125, %v1141
  %v1158 = vadd.f32 %v1126, %v1142
  %v1159 = vadd.f32 %v1127, %v1143
  %v1160 = vadd.f32 %v1128, %v1144
  %v1161 = vmul.f32 %v905, %v566
  %v1162 = vmul.f32 %v906, %v569
  %v1163 = vmul.f32 %v907, %v574
  %v1164 = vmul.f32 %v908, %v577
  %v1165 = vmul.f32 %v909, %v582
  %v1166 = vmul.f32 %v910, %v585
  %v1167 = vmul.f32 %v911, %v590
  %v1168 = vmul.f32 %v912, %v593
  %v1169 = vmul.f32 %v913, %v598
  %v1170 = vmul.f32 %v914, %v601
  %v1171 = vmul.f32 %v915, %v606
  %v1172 = vmul.f32 %v916, %v609
  %v1173 = vmul.f32 %v917, %v614
  %v1174 = vmul.f32 %v918, %v617
  %v1175 = vmul.f32 %v919, %v622
  %v1176 = vmul.f32 %v920, %v625
  %v1177 = vsub.f32 %v1145, %v1161
  %v1178 = vsub.f32 %v1146, %v1162
  %v1179 = vsub.f32 %v1147, %v1163
  %v1180 = vsub.f32 %v1148, %v1164
  %v1181 = vsub.f32 %v1149, %v1165
  %v1182 = vsub.f32 %v1150, %v1166
  %v1183 = vsub.f32 %v1151, %v1167
  %v1184 = vsub.f32 %v1152, %v1168
  %v1185 = vsub.f32 %v1153, %v1169
  %v1186 = vsub.f32 %v1154, %v1170
  %v1187 = vsub.f32 %v1155, %v1171
  %v1188 = vsub.f32 %v1156, %v1172
  %v1189 = vsub.f32 %v1157, %v1173
  %v1190 = vsub.f32 %v1158, %v1174
  %v1191 = vsub.f32 %v1159, %v1175
  %v1192 = vsub.f32 %v1160, %v1176
  %s1193 = scalar_lea.vmem %s3, 64
  %v1194 = vld [vmem:[%s1193] sm:$0xf]
  %v1195 = vld [vmem:[%s1193 + $0x4] sm:$0xf]
  %v1196 = vld [vmem:[%s1193 + $0x8] sm:$0xf]
  %v1197 = vld [vmem:[%s1193 + $0xc] sm:$0xf]
  %v1198 = vld [vmem:[%s1193 + $0x10] sm:$0xf]
  %v1199 = vld [vmem:[%s1193 + $0x14] sm:$0xf]
  %v1200 = vld [vmem:[%s1193 + $0x18] sm:$0xf]
  %v1201 = vld [vmem:[%s1193 + $0x1c] sm:$0xf]
  %v1202 = vld [vmem:[%s1193 + $0x20] sm:$0xf]
  %v1203 = vld [vmem:[%s1193 + $0x24] sm:$0xf]
  %v1204 = vld [vmem:[%s1193 + $0x28] sm:$0xf]
  %v1205 = vld [vmem:[%s1193 + $0x2c] sm:$0xf]
  %v1206 = vld [vmem:[%s1193 + $0x30] sm:$0xf]
  %v1207 = vld [vmem:[%s1193 + $0x34] sm:$0xf]
  %v1208 = vld [vmem:[%s1193 + $0x38] sm:$0xf]
  %v1209 = vld [vmem:[%s1193 + $0x3c] sm:$0xf]
  %v1210 = vunpack.c.l.bf16 %v1194
  %v1211 = vunpack.c.l.bf16 %v1195
  %v1212 = vunpack.c.l.bf16 %v1196
  %v1213 = vunpack.c.l.bf16 %v1197
  %v1214 = vunpack.c.l.bf16 %v1198
  %v1215 = vunpack.c.l.bf16 %v1199
  %v1216 = vunpack.c.l.bf16 %v1200
  %v1217 = vunpack.c.l.bf16 %v1201
  %v1218 = vunpack.c.l.bf16 %v1202
  %v1219 = vunpack.c.l.bf16 %v1203
  %v1220 = vunpack.c.l.bf16 %v1204
  %v1221 = vunpack.c.l.bf16 %v1205
  %v1222 = vunpack.c.l.bf16 %v1206
  %v1223 = vunpack.c.l.bf16 %v1207
  %v1224 = vunpack.c.l.bf16 %v1208
  %v1225 = vunpack.c.l.bf16 %v1209
  %v1226 = vmul.f32 %v1177, %v1210
  %v1227 = vmul.f32 %v1178, %v1211
  %v1228 = vmul.f32 %v1179, %v1212
  %v1229 = vmul.f32 %v1180, %v1213
  %v1230 = vmul.f32 %v1181, %v1214
  %v1231 = vmul.f32 %v1182, %v1215
  %v1232 = vmul.f32 %v1183, %v1216
  %v1233 = vmul.f32 %v1184, %v1217
  %v1234 = vmul.f32 %v1185, %v1218
  %v1235 = vmul.f32 %v1186, %v1219
  %v1236 = vmul.f32 %v1187, %v1220
  %v1237 = vmul.f32 %v1188, %v1221
  %v1238 = vmul.f32 %v1189, %v1222
  %v1239 = vmul.f32 %v1190, %v1223
  %v1240 = vmul.f32 %v1191, %v1224
  %v1241 = vmul.f32 %v1192, %v1225
  %v1242 = vadd.f32 %v1065, %v1226
  %v1243 = vadd.f32 %v1066, %v1227
  %v1244 = vadd.f32 %v1067, %v1228
  %v1245 = vadd.f32 %v1068, %v1229
  %v1246 = vadd.f32 %v1069, %v1230
  %v1247 = vadd.f32 %v1070, %v1231
  %v1248 = vadd.f32 %v1071, %v1232
  %v1249 = vadd.f32 %v1072, %v1233
  %v1250 = vadd.f32 %v1073, %v1234
  %v1251 = vadd.f32 %v1074, %v1235
  %v1252 = vadd.f32 %v1075, %v1236
  %v1253 = vadd.f32 %v1076, %v1237
  %v1254 = vadd.f32 %v1077, %v1238
  %v1255 = vadd.f32 %v1078, %v1239
  %v1256 = vadd.f32 %v1079, %v1240
  %v1257 = vadd.f32 %v1080, %v1241
  %v1258 = vmul.f32 %v806, %v566
  %v1259 = vmul.f32 %v807, %v569
  %v1260 = vmul.f32 %v808, %v574
  %v1261 = vmul.f32 %v809, %v577
  %v1262 = vmul.f32 %v810, %v582
  %v1263 = vmul.f32 %v811, %v585
  %v1264 = vmul.f32 %v812, %v590
  %v1265 = vmul.f32 %v813, %v593
  %v1266 = vmul.f32 %v814, %v598
  %v1267 = vmul.f32 %v815, %v601
  %v1268 = vmul.f32 %v816, %v606
  %v1269 = vmul.f32 %v817, %v609
  %v1270 = vmul.f32 %v818, %v614
  %v1271 = vmul.f32 %v819, %v617
  %v1272 = vmul.f32 %v820, %v622
  %v1273 = vmul.f32 %v821, %v625
  %v1274 = vmul.f32 %v839, %v728
  %v1275 = vmul.f32 %v840, %v731
  %v1276 = vmul.f32 %v841, %v736
  %v1277 = vmul.f32 %v842, %v739
  %v1278 = vmul.f32 %v843, %v744
  %v1279 = vmul.f32 %v844, %v747
  %v1280 = vmul.f32 %v845, %v752
  %v1281 = vmul.f32 %v846, %v755
  %v1282 = vmul.f32 %v847, %v760
  %v1283 = vmul.f32 %v848, %v763
  %v1284 = vmul.f32 %v849, %v768
  %v1285 = vmul.f32 %v850, %v771
  %v1286 = vmul.f32 %v851, %v776
  %v1287 = vmul.f32 %v852, %v779
  %v1288 = vmul.f32 %v853, %v784
  %v1289 = vmul.f32 %v854, %v787
  %v1290 = vsub.f32 %v1258, %v1274
  %v1291 = vsub.f32 %v1259, %v1275
  %v1292 = vsub.f32 %v1260, %v1276
  %v1293 = vsub.f32 %v1261, %v1277
  %v1294 = vsub.f32 %v1262, %v1278
  %v1295 = vsub.f32 %v1263, %v1279
  %v1296 = vsub.f32 %v1264, %v1280
  %v1297 = vsub.f32 %v1265, %v1281
  %v1298 = vsub.f32 %v1266, %v1282
  %v1299 = vsub.f32 %v1267, %v1283
  %v1300 = vsub.f32 %v1268, %v1284
  %v1301 = vsub.f32 %v1269, %v1285
  %v1302 = vsub.f32 %v1270, %v1286
  %v1303 = vsub.f32 %v1271, %v1287
  %v1304 = vsub.f32 %v1272, %v1288
  %v1305 = vsub.f32 %v1273, %v1289
  %v1306 = vmul.f32 %v872, %v242
  %v1307 = vmul.f32 %v873, %v245
  %v1308 = vmul.f32 %v874, %v250
  %v1309 = vmul.f32 %v875, %v253
  %v1310 = vmul.f32 %v876, %v258
  %v1311 = vmul.f32 %v877, %v261
  %v1312 = vmul.f32 %v878, %v266
  %v1313 = vmul.f32 %v879, %v269
  %v1314 = vmul.f32 %v880, %v274
  %v1315 = vmul.f32 %v881, %v277
  %v1316 = vmul.f32 %v882, %v282
  %v1317 = vmul.f32 %v883, %v285
  %v1318 = vmul.f32 %v884, %v290
  %v1319 = vmul.f32 %v885, %v293
  %v1320 = vmul.f32 %v886, %v298
  %v1321 = vmul.f32 %v887, %v301
  %v1322 = vadd.f32 %v1290, %v1306
  %v1323 = vadd.f32 %v1291, %v1307
  %v1324 = vadd.f32 %v1292, %v1308
  %v1325 = vadd.f32 %v1293, %v1309
  %v1326 = vadd.f32 %v1294, %v1310
  %v1327 = vadd.f32 %v1295, %v1311
  %v1328 = vadd.f32 %v1296, %v1312
  %v1329 = vadd.f32 %v1297, %v1313
  %v1330 = vadd.f32 %v1298, %v1314
  %v1331 = vadd.f32 %v1299, %v1315
  %v1332 = vadd.f32 %v1300, %v1316
  %v1333 = vadd.f32 %v1301, %v1317
  %v1334 = vadd.f32 %v1302, %v1318
  %v1335 = vadd.f32 %v1303, %v1319
  %v1336 = vadd.f32 %v1304, %v1320
  %v1337 = vadd.f32 %v1305, %v1321
  %v1338 = vmul.f32 %v905, %v404
  %v1339 = vmul.f32 %v906, %v407
  %v1340 = vmul.f32 %v907, %v412
  %v1341 = vmul.f32 %v908, %v415
  %v1342 = vmul.f32 %v909, %v420
  %v1343 = vmul.f32 %v910, %v423
  %v1344 = vmul.f32 %v911, %v428
  %v1345 = vmul.f32 %v912, %v431
  %v1346 = vmul.f32 %v913, %v436
  %v1347 = vmul.f32 %v914, %v439
  %v1348 = vmul.f32 %v915, %v444
  %v1349 = vmul.f32 %v916, %v447
  %v1350 = vmul.f32 %v917, %v452
  %v1351 = vmul.f32 %v918, %v455
  %v1352 = vmul.f32 %v919, %v460
  %v1353 = vmul.f32 %v920, %v463
  %v1354 = vadd.f32 %v1322, %v1338
  %v1355 = vadd.f32 %v1323, %v1339
  %v1356 = vadd.f32 %v1324, %v1340
  %v1357 = vadd.f32 %v1325, %v1341
  %v1358 = vadd.f32 %v1326, %v1342
  %v1359 = vadd.f32 %v1327, %v1343
  %v1360 = vadd.f32 %v1328, %v1344
  %v1361 = vadd.f32 %v1329, %v1345
  %v1362 = vadd.f32 %v1330, %v1346
  %v1363 = vadd.f32 %v1331, %v1347
  %v1364 = vadd.f32 %v1332, %v1348
  %v1365 = vadd.f32 %v1333, %v1349
  %v1366 = vadd.f32 %v1334, %v1350
  %v1367 = vadd.f32 %v1335, %v1351
  %v1368 = vadd.f32 %v1336, %v1352
  %v1369 = vadd.f32 %v1337, %v1353
  %s1370 = scalar_lea.vmem %s3, 128
  %v1371 = vld [vmem:[%s1370] sm:$0xf]
  %v1372 = vld [vmem:[%s1370 + $0x4] sm:$0xf]
  %v1373 = vld [vmem:[%s1370 + $0x8] sm:$0xf]
  %v1374 = vld [vmem:[%s1370 + $0xc] sm:$0xf]
  %v1375 = vld [vmem:[%s1370 + $0x10] sm:$0xf]
  %v1376 = vld [vmem:[%s1370 + $0x14] sm:$0xf]
  %v1377 = vld [vmem:[%s1370 + $0x18] sm:$0xf]
  %v1378 = vld [vmem:[%s1370 + $0x1c] sm:$0xf]
  %v1379 = vld [vmem:[%s1370 + $0x20] sm:$0xf]
  %v1380 = vld [vmem:[%s1370 + $0x24] sm:$0xf]
  %v1381 = vld [vmem:[%s1370 + $0x28] sm:$0xf]
  %v1382 = vld [vmem:[%s1370 + $0x2c] sm:$0xf]
  %v1383 = vld [vmem:[%s1370 + $0x30] sm:$0xf]
  %v1384 = vld [vmem:[%s1370 + $0x34] sm:$0xf]
  %v1385 = vld [vmem:[%s1370 + $0x38] sm:$0xf]
  %v1386 = vld [vmem:[%s1370 + $0x3c] sm:$0xf]
  %v1387 = vunpack.c.l.bf16 %v1371
  %v1388 = vunpack.c.l.bf16 %v1372
  %v1389 = vunpack.c.l.bf16 %v1373
  %v1390 = vunpack.c.l.bf16 %v1374
  %v1391 = vunpack.c.l.bf16 %v1375
  %v1392 = vunpack.c.l.bf16 %v1376
  %v1393 = vunpack.c.l.bf16 %v1377
  %v1394 = vunpack.c.l.bf16 %v1378
  %v1395 = vunpack.c.l.bf16 %v1379
  %v1396 = vunpack.c.l.bf16 %v1380
  %v1397 = vunpack.c.l.bf16 %v1381
  %v1398 = vunpack.c.l.bf16 %v1382
  %v1399 = vunpack.c.l.bf16 %v1383
  %v1400 = vunpack.c.l.bf16 %v1384
  %v1401 = vunpack.c.l.bf16 %v1385
  %v1402 = vunpack.c.l.bf16 %v1386
  %v1403 = vmul.f32 %v1354, %v1387
  %v1404 = vmul.f32 %v1355, %v1388
  %v1405 = vmul.f32 %v1356, %v1389
  %v1406 = vmul.f32 %v1357, %v1390
  %v1407 = vmul.f32 %v1358, %v1391
  %v1408 = vmul.f32 %v1359, %v1392
  %v1409 = vmul.f32 %v1360, %v1393
  %v1410 = vmul.f32 %v1361, %v1394
  %v1411 = vmul.f32 %v1362, %v1395
  %v1412 = vmul.f32 %v1363, %v1396
  %v1413 = vmul.f32 %v1364, %v1397
  %v1414 = vmul.f32 %v1365, %v1398
  %v1415 = vmul.f32 %v1366, %v1399
  %v1416 = vmul.f32 %v1367, %v1400
  %v1417 = vmul.f32 %v1368, %v1401
  %v1418 = vmul.f32 %v1369, %v1402
  %v1419 = vadd.f32 %v1242, %v1403
  %v1420 = vadd.f32 %v1243, %v1404
  %v1421 = vadd.f32 %v1244, %v1405
  %v1422 = vadd.f32 %v1245, %v1406
  %v1423 = vadd.f32 %v1246, %v1407
  %v1424 = vadd.f32 %v1247, %v1408
  %v1425 = vadd.f32 %v1248, %v1409
  %v1426 = vadd.f32 %v1249, %v1410
  %v1427 = vadd.f32 %v1250, %v1411
  %v1428 = vadd.f32 %v1251, %v1412
  %v1429 = vadd.f32 %v1252, %v1413
  %v1430 = vadd.f32 %v1253, %v1414
  %v1431 = vadd.f32 %v1254, %v1415
  %v1432 = vadd.f32 %v1255, %v1416
  %v1433 = vadd.f32 %v1256, %v1417
  %v1434 = vadd.f32 %v1257, %v1418
  %v1435 = vmul.f32 %v806, %v728
  %v1436 = vmul.f32 %v807, %v731
  %v1437 = vmul.f32 %v808, %v736
  %v1438 = vmul.f32 %v809, %v739
  %v1439 = vmul.f32 %v810, %v744
  %v1440 = vmul.f32 %v811, %v747
  %v1441 = vmul.f32 %v812, %v752
  %v1442 = vmul.f32 %v813, %v755
  %v1443 = vmul.f32 %v814, %v760
  %v1444 = vmul.f32 %v815, %v763
  %v1445 = vmul.f32 %v816, %v768
  %v1446 = vmul.f32 %v817, %v771
  %v1447 = vmul.f32 %v818, %v776
  %v1448 = vmul.f32 %v819, %v779
  %v1449 = vmul.f32 %v820, %v784
  %v1450 = vmul.f32 %v821, %v787
  %v1451 = vmul.f32 %v839, %v566
  %v1452 = vmul.f32 %v840, %v569
  %v1453 = vmul.f32 %v841, %v574
  %v1454 = vmul.f32 %v842, %v577
  %v1455 = vmul.f32 %v843, %v582
  %v1456 = vmul.f32 %v844, %v585
  %v1457 = vmul.f32 %v845, %v590
  %v1458 = vmul.f32 %v846, %v593
  %v1459 = vmul.f32 %v847, %v598
  %v1460 = vmul.f32 %v848, %v601
  %v1461 = vmul.f32 %v849, %v606
  %v1462 = vmul.f32 %v850, %v609
  %v1463 = vmul.f32 %v851, %v614
  %v1464 = vmul.f32 %v852, %v617
  %v1465 = vmul.f32 %v853, %v622
  %v1466 = vmul.f32 %v854, %v625
  %v1467 = vadd.f32 %v1435, %v1451
  %v1468 = vadd.f32 %v1436, %v1452
  %v1469 = vadd.f32 %v1437, %v1453
  %v1470 = vadd.f32 %v1438, %v1454
  %v1471 = vadd.f32 %v1439, %v1455
  %v1472 = vadd.f32 %v1440, %v1456
  %v1473 = vadd.f32 %v1441, %v1457
  %v1474 = vadd.f32 %v1442, %v1458
  %v1475 = vadd.f32 %v1443, %v1459
  %v1476 = vadd.f32 %v1444, %v1460
  %v1477 = vadd.f32 %v1445, %v1461
  %v1478 = vadd.f32 %v1446, %v1462
  %v1479 = vadd.f32 %v1447, %v1463
  %v1480 = vadd.f32 %v1448, %v1464
  %v1481 = vadd.f32 %v1449, %v1465
  %v1482 = vadd.f32 %v1450, %v1466
  %v1483 = vmul.f32 %v872, %v404
  %v1484 = vmul.f32 %v873, %v407
  %v1485 = vmul.f32 %v874, %v412
  %v1486 = vmul.f32 %v875, %v415
  %v1487 = vmul.f32 %v876, %v420
  %v1488 = vmul.f32 %v877, %v423
  %v1489 = vmul.f32 %v878, %v428
  %v1490 = vmul.f32 %v879, %v431
  %v1491 = vmul.f32 %v880, %v436
  %v1492 = vmul.f32 %v881, %v439
  %v1493 = vmul.f32 %v882, %v444
  %v1494 = vmul.f32 %v883, %v447
  %v1495 = vmul.f32 %v884, %v452
  %v1496 = vmul.f32 %v885, %v455
  %v1497 = vmul.f32 %v886, %v460
  %v1498 = vmul.f32 %v887, %v463
  %v1499 = vsub.f32 %v1467, %v1483
  %v1500 = vsub.f32 %v1468, %v1484
  %v1501 = vsub.f32 %v1469, %v1485
  %v1502 = vsub.f32 %v1470, %v1486
  %v1503 = vsub.f32 %v1471, %v1487
  %v1504 = vsub.f32 %v1472, %v1488
  %v1505 = vsub.f32 %v1473, %v1489
  %v1506 = vsub.f32 %v1474, %v1490
  %v1507 = vsub.f32 %v1475, %v1491
  %v1508 = vsub.f32 %v1476, %v1492
  %v1509 = vsub.f32 %v1477, %v1493
  %v1510 = vsub.f32 %v1478, %v1494
  %v1511 = vsub.f32 %v1479, %v1495
  %v1512 = vsub.f32 %v1480, %v1496
  %v1513 = vsub.f32 %v1481, %v1497
  %v1514 = vsub.f32 %v1482, %v1498
  %v1515 = vmul.f32 %v905, %v242
  %v1516 = vmul.f32 %v906, %v245
  %v1517 = vmul.f32 %v907, %v250
  %v1518 = vmul.f32 %v908, %v253
  %v1519 = vmul.f32 %v909, %v258
  %v1520 = vmul.f32 %v910, %v261
  %v1521 = vmul.f32 %v911, %v266
  %v1522 = vmul.f32 %v912, %v269
  %v1523 = vmul.f32 %v913, %v274
  %v1524 = vmul.f32 %v914, %v277
  %v1525 = vmul.f32 %v915, %v282
  %v1526 = vmul.f32 %v916, %v285
  %v1527 = vmul.f32 %v917, %v290
  %v1528 = vmul.f32 %v918, %v293
  %v1529 = vmul.f32 %v919, %v298
  %v1530 = vmul.f32 %v920, %v301
  %v1531 = vadd.f32 %v1499, %v1515
  %v1532 = vadd.f32 %v1500, %v1516
  %v1533 = vadd.f32 %v1501, %v1517
  %v1534 = vadd.f32 %v1502, %v1518
  %v1535 = vadd.f32 %v1503, %v1519
  %v1536 = vadd.f32 %v1504, %v1520
  %v1537 = vadd.f32 %v1505, %v1521
  %v1538 = vadd.f32 %v1506, %v1522
  %v1539 = vadd.f32 %v1507, %v1523
  %v1540 = vadd.f32 %v1508, %v1524
  %v1541 = vadd.f32 %v1509, %v1525
  %v1542 = vadd.f32 %v1510, %v1526
  %v1543 = vadd.f32 %v1511, %v1527
  %v1544 = vadd.f32 %v1512, %v1528
  %v1545 = vadd.f32 %v1513, %v1529
  %v1546 = vadd.f32 %v1514, %v1530
  %s1547 = scalar_lea.vmem %s3, 192
  %v1548 = vld [vmem:[%s1547] sm:$0xf]
  %v1549 = vld [vmem:[%s1547 + $0x4] sm:$0xf]
  %v1550 = vld [vmem:[%s1547 + $0x8] sm:$0xf]
  %v1551 = vld [vmem:[%s1547 + $0xc] sm:$0xf]
  %v1552 = vld [vmem:[%s1547 + $0x10] sm:$0xf]
  %v1553 = vld [vmem:[%s1547 + $0x14] sm:$0xf]
  %v1554 = vld [vmem:[%s1547 + $0x18] sm:$0xf]
  %v1555 = vld [vmem:[%s1547 + $0x1c] sm:$0xf]
  %v1556 = vld [vmem:[%s1547 + $0x20] sm:$0xf]
  %v1557 = vld [vmem:[%s1547 + $0x24] sm:$0xf]
  %v1558 = vld [vmem:[%s1547 + $0x28] sm:$0xf]
  %v1559 = vld [vmem:[%s1547 + $0x2c] sm:$0xf]
  %v1560 = vld [vmem:[%s1547 + $0x30] sm:$0xf]
  %v1561 = vld [vmem:[%s1547 + $0x34] sm:$0xf]
  %v1562 = vld [vmem:[%s1547 + $0x38] sm:$0xf]
  %v1563 = vld [vmem:[%s1547 + $0x3c] sm:$0xf]
  %v1564 = vunpack.c.l.bf16 %v1548
  %v1565 = vunpack.c.l.bf16 %v1549
  %v1566 = vunpack.c.l.bf16 %v1550
  %v1567 = vunpack.c.l.bf16 %v1551
  %v1568 = vunpack.c.l.bf16 %v1552
  %v1569 = vunpack.c.l.bf16 %v1553
  %v1570 = vunpack.c.l.bf16 %v1554
  %v1571 = vunpack.c.l.bf16 %v1555
  %v1572 = vunpack.c.l.bf16 %v1556
  %v1573 = vunpack.c.l.bf16 %v1557
  %v1574 = vunpack.c.l.bf16 %v1558
  %v1575 = vunpack.c.l.bf16 %v1559
  %v1576 = vunpack.c.l.bf16 %v1560
  %v1577 = vunpack.c.l.bf16 %v1561
  %v1578 = vunpack.c.l.bf16 %v1562
  %v1579 = vunpack.c.l.bf16 %v1563
  %v1580 = vmul.f32 %v1531, %v1564
  %v1581 = vmul.f32 %v1532, %v1565
  %v1582 = vmul.f32 %v1533, %v1566
  %v1583 = vmul.f32 %v1534, %v1567
  %v1584 = vmul.f32 %v1535, %v1568
  %v1585 = vmul.f32 %v1536, %v1569
  %v1586 = vmul.f32 %v1537, %v1570
  %v1587 = vmul.f32 %v1538, %v1571
  %v1588 = vmul.f32 %v1539, %v1572
  %v1589 = vmul.f32 %v1540, %v1573
  %v1590 = vmul.f32 %v1541, %v1574
  %v1591 = vmul.f32 %v1542, %v1575
  %v1592 = vmul.f32 %v1543, %v1576
  %v1593 = vmul.f32 %v1544, %v1577
  %v1594 = vmul.f32 %v1545, %v1578
  %v1595 = vmul.f32 %v1546, %v1579
  %v1596 = vadd.f32 %v1419, %v1580
  %v1597 = vadd.f32 %v1420, %v1581
  %v1598 = vadd.f32 %v1421, %v1582
  %v1599 = vadd.f32 %v1422, %v1583
  %v1600 = vadd.f32 %v1423, %v1584
  %v1601 = vadd.f32 %v1424, %v1585
  %v1602 = vadd.f32 %v1425, %v1586
  %v1603 = vadd.f32 %v1426, %v1587
  %v1604 = vadd.f32 %v1427, %v1588
  %v1605 = vadd.f32 %v1428, %v1589
  %v1606 = vadd.f32 %v1429, %v1590
  %v1607 = vadd.f32 %v1430, %v1591
  %v1608 = vadd.f32 %v1431, %v1592
  %v1609 = vadd.f32 %v1432, %v1593
  %v1610 = vadd.f32 %v1433, %v1594
  %v1611 = vadd.f32 %v1434, %v1595
  %vm1612 = vcmask 261120
  %v1613 = vsel %vm1612, %v1596, 0.0
  %1614 = vadd.xlane.f32.xlu0 %v1613
  %v1615 = vpop.xlane.xlu0 %1614
  %v1616 = vsel %vm1612, %v1597, 0.0
  %1617 = vadd.xlane.f32.xlu0 %v1616
  %v1618 = vpop.xlane.xlu0 %1617
  %v1619 = vsel %vm1612, %v1598, 0.0
  %1620 = vadd.xlane.f32.xlu0 %v1619
  %v1621 = vpop.xlane.xlu0 %1620
  %v1622 = vsel %vm1612, %v1599, 0.0
  %1623 = vadd.xlane.f32.xlu0 %v1622
  %v1624 = vpop.xlane.xlu0 %1623
  %v1625 = vsel %vm1612, %v1600, 0.0
  %1626 = vadd.xlane.f32.xlu0 %v1625
  %v1627 = vpop.xlane.xlu0 %1626
  %v1628 = vsel %vm1612, %v1601, 0.0
  %1629 = vadd.xlane.f32.xlu0 %v1628
  %v1630 = vpop.xlane.xlu0 %1629
  %v1631 = vsel %vm1612, %v1602, 0.0
  %1632 = vadd.xlane.f32.xlu0 %v1631
  %v1633 = vpop.xlane.xlu0 %1632
  %v1634 = vsel %vm1612, %v1603, 0.0
  %1635 = vadd.xlane.f32.xlu0 %v1634
  %v1636 = vpop.xlane.xlu0 %1635
  %v1637 = vsel %vm1612, %v1604, 0.0
  %1638 = vadd.xlane.f32.xlu0 %v1637
  %v1639 = vpop.xlane.xlu0 %1638
  %v1640 = vsel %vm1612, %v1605, 0.0
  %1641 = vadd.xlane.f32.xlu0 %v1640
  %v1642 = vpop.xlane.xlu0 %1641
  %v1643 = vsel %vm1612, %v1606, 0.0
  %1644 = vadd.xlane.f32.xlu0 %v1643
  %v1645 = vpop.xlane.xlu0 %1644
  %v1646 = vsel %vm1612, %v1607, 0.0
  %1647 = vadd.xlane.f32.xlu0 %v1646
  %v1648 = vpop.xlane.xlu0 %1647
  %v1649 = vsel %vm1612, %v1608, 0.0
  %1650 = vadd.xlane.f32.xlu0 %v1649
  %v1651 = vpop.xlane.xlu0 %1650
  %v1652 = vsel %vm1612, %v1609, 0.0
  %1653 = vadd.xlane.f32.xlu0 %v1652
  %v1654 = vpop.xlane.xlu0 %1653
  %v1655 = vsel %vm1612, %v1610, 0.0
  %1656 = vadd.xlane.f32.xlu0 %v1655
  %v1657 = vpop.xlane.xlu0 %1656
  %v1658 = vsel %vm1612, %v1611, 0.0
  %1659 = vadd.xlane.f32.xlu0 %v1658
  %v1660 = vpop.xlane.xlu0 %1659
  %v1661 = vld [vmem:[%s1] sm:$0xff]
  %v1662 = vld [vmem:[%s1 + $0x8] sm:$0xff]
  %v1663 = vld [vmem:[%s1 + $0x10] sm:$0xff]
  %v1664 = vld [vmem:[%s1 + $0x18] sm:$0xff]
  %v1665 = vld [vmem:[%s1 + $0x20] sm:$0xff]
  %v1666 = vld [vmem:[%s1 + $0x28] sm:$0xff]
  %v1667 = vld [vmem:[%s1 + $0x30] sm:$0xff]
  %v1668 = vld [vmem:[%s1 + $0x38] sm:$0xff]
  %v1669 = vld [vmem:[%s1 + $0x40] sm:$0xff]
  %v1670 = vld [vmem:[%s1 + $0x48] sm:$0xff]
  %v1671 = vld [vmem:[%s1 + $0x50] sm:$0xff]
  %v1672 = vld [vmem:[%s1 + $0x58] sm:$0xff]
  %v1673 = vld [vmem:[%s1 + $0x60] sm:$0xff]
  %v1674 = vld [vmem:[%s1 + $0x68] sm:$0xff]
  %v1675 = vld [vmem:[%s1 + $0x70] sm:$0xff]
  %v1676 = vld [vmem:[%s1 + $0x78] sm:$0xff]
  %v1677 = vsub.f32 0.0, %v1661
  %v1678 = vsub.f32 0.0, %v1662
  %v1679 = vsub.f32 0.0, %v1663
  %v1680 = vsub.f32 0.0, %v1664
  %v1681 = vsub.f32 0.0, %v1665
  %v1682 = vsub.f32 0.0, %v1666
  %v1683 = vsub.f32 0.0, %v1667
  %v1684 = vsub.f32 0.0, %v1668
  %v1685 = vsub.f32 0.0, %v1669
  %v1686 = vsub.f32 0.0, %v1670
  %v1687 = vsub.f32 0.0, %v1671
  %v1688 = vsub.f32 0.0, %v1672
  %v1689 = vsub.f32 0.0, %v1673
  %v1690 = vsub.f32 0.0, %v1674
  %v1691 = vsub.f32 0.0, %v1675
  %v1692 = vsub.f32 0.0, %v1676
  %v1693 = vmul.f32 %v1677, %v1615
  %v1694 = vmul.f32 %v1678, %v1618
  %v1695 = vmul.f32 %v1679, %v1621
  %v1696 = vmul.f32 %v1680, %v1624
  %v1697 = vmul.f32 %v1681, %v1627
  %v1698 = vmul.f32 %v1682, %v1630
  %v1699 = vmul.f32 %v1683, %v1633
  %v1700 = vmul.f32 %v1684, %v1636
  %v1701 = vmul.f32 %v1685, %v1639
  %v1702 = vmul.f32 %v1686, %v1642
  %v1703 = vmul.f32 %v1687, %v1645
  %v1704 = vmul.f32 %v1688, %v1648
  %v1705 = vmul.f32 %v1689, %v1651
  %v1706 = vmul.f32 %v1690, %v1654
  %v1707 = vmul.f32 %v1691, %v1657
  %v1708 = vmul.f32 %v1692, %v1660
  %v1709 = vmax.f32 %v1693, 0.0
  %v1710 = vmax.f32 %v1694, 0.0
  %v1711 = vmax.f32 %v1695, 0.0
  %v1712 = vmax.f32 %v1696, 0.0
  %v1713 = vmax.f32 %v1697, 0.0
  %v1714 = vmax.f32 %v1698, 0.0
  %v1715 = vmax.f32 %v1699, 0.0
  %v1716 = vmax.f32 %v1700, 0.0
  %v1717 = vmax.f32 %v1701, 0.0
  %v1718 = vmax.f32 %v1702, 0.0
  %v1719 = vmax.f32 %v1703, 0.0
  %v1720 = vmax.f32 %v1704, 0.0
  %v1721 = vmax.f32 %v1705, 0.0
  %v1722 = vmax.f32 %v1706, 0.0
  %v1723 = vmax.f32 %v1707, 0.0
  %v1724 = vmax.f32 %v1708, 0.0
  %v1725 = vand.u32 2147483647, %v1693
  %v1726 = vand.u32 2147483647, %v1694
  %v1727 = vand.u32 2147483647, %v1695
  %v1728 = vand.u32 2147483647, %v1696
  %v1729 = vand.u32 2147483647, %v1697
  %v1730 = vand.u32 2147483647, %v1698
  %v1731 = vand.u32 2147483647, %v1699
  %v1732 = vand.u32 2147483647, %v1700
  %v1733 = vand.u32 2147483647, %v1701
  %v1734 = vand.u32 2147483647, %v1702
  %v1735 = vand.u32 2147483647, %v1703
  %v1736 = vand.u32 2147483647, %v1704
  %v1737 = vand.u32 2147483647, %v1705
  %v1738 = vand.u32 2147483647, %v1706
  %v1739 = vand.u32 2147483647, %v1707
  %v1740 = vand.u32 2147483647, %v1708
  %v1741 = vsub.f32 0.0, %v1725
  %v1742 = vsub.f32 0.0, %v1726
  %v1743 = vsub.f32 0.0, %v1727
  %v1744 = vsub.f32 0.0, %v1728
  %v1745 = vsub.f32 0.0, %v1729
  %v1746 = vsub.f32 0.0, %v1730
  %v1747 = vsub.f32 0.0, %v1731
  %v1748 = vsub.f32 0.0, %v1732
  %v1749 = vsub.f32 0.0, %v1733
  %v1750 = vsub.f32 0.0, %v1734
  %v1751 = vsub.f32 0.0, %v1735
  %v1752 = vsub.f32 0.0, %v1736
  %v1753 = vsub.f32 0.0, %v1737
  %v1754 = vsub.f32 0.0, %v1738
  %v1755 = vsub.f32 0.0, %v1739
  %v1756 = vsub.f32 0.0, %v1740
  %v1757 = vmul.f32 %v1741, 1.442695
  %v1758 = vpow.pop %v1757
  %v1759 = vmul.f32 %v1742, 1.442695
  %v1760 = vpow.pop %v1759
  %v1761 = vmul.f32 %v1743, 1.442695
  %v1762 = vpow.pop %v1761
  %v1763 = vmul.f32 %v1744, 1.442695
  %v1764 = vpow.pop %v1763
  %v1765 = vmul.f32 %v1745, 1.442695
  %v1766 = vpow.pop %v1765
  %v1767 = vmul.f32 %v1746, 1.442695
  %v1768 = vpow.pop %v1767
  %v1769 = vmul.f32 %v1747, 1.442695
  %v1770 = vpow.pop %v1769
  %v1771 = vmul.f32 %v1748, 1.442695
  %v1772 = vpow.pop %v1771
  %v1773 = vmul.f32 %v1749, 1.442695
  %v1774 = vpow.pop %v1773
  %v1775 = vmul.f32 %v1750, 1.442695
  %v1776 = vpow.pop %v1775
  %v1777 = vmul.f32 %v1751, 1.442695
  %v1778 = vpow.pop %v1777
  %v1779 = vmul.f32 %v1752, 1.442695
  %v1780 = vpow.pop %v1779
  %v1781 = vmul.f32 %v1753, 1.442695
  %v1782 = vpow.pop %v1781
  %v1783 = vmul.f32 %v1754, 1.442695
  %v1784 = vpow.pop %v1783
  %v1785 = vmul.f32 %v1755, 1.442695
  %v1786 = vpow.pop %v1785
  %v1787 = vmul.f32 %v1756, 1.442695
  %v1788 = vpow.pop %v1787
  %v1789 = vadd.f32 %v1758, 1.0
  %v1790 = vadd.f32 %v1760, 1.0
  %v1791 = vadd.f32 %v1762, 1.0
  %v1792 = vadd.f32 %v1764, 1.0
  %v1793 = vadd.f32 %v1766, 1.0
  %v1794 = vadd.f32 %v1768, 1.0
  %v1795 = vadd.f32 %v1770, 1.0
  %v1796 = vadd.f32 %v1772, 1.0
  %v1797 = vadd.f32 %v1774, 1.0
  %v1798 = vadd.f32 %v1776, 1.0
  %v1799 = vadd.f32 %v1778, 1.0
  %v1800 = vadd.f32 %v1780, 1.0
  %v1801 = vadd.f32 %v1782, 1.0
  %v1802 = vadd.f32 %v1784, 1.0
  %v1803 = vadd.f32 %v1786, 1.0
  %v1804 = vadd.f32 %v1788, 1.0
  %v1805 = vlog2.pop %v1789
  %v1806 = vmul.f32 %v1805, 0.6931472
  %v1807 = vlog2.pop %v1790
  %v1808 = vmul.f32 %v1807, 0.6931472
  %v1809 = vlog2.pop %v1791
  %v1810 = vmul.f32 %v1809, 0.6931472
  %v1811 = vlog2.pop %v1792
  %v1812 = vmul.f32 %v1811, 0.6931472
  %v1813 = vlog2.pop %v1793
  %v1814 = vmul.f32 %v1813, 0.6931472
  %v1815 = vlog2.pop %v1794
  %v1816 = vmul.f32 %v1815, 0.6931472
  %v1817 = vlog2.pop %v1795
  %v1818 = vmul.f32 %v1817, 0.6931472
  %v1819 = vlog2.pop %v1796
  %v1820 = vmul.f32 %v1819, 0.6931472
  %v1821 = vlog2.pop %v1797
  %v1822 = vmul.f32 %v1821, 0.6931472
  %v1823 = vlog2.pop %v1798
  %v1824 = vmul.f32 %v1823, 0.6931472
  %v1825 = vlog2.pop %v1799
  %v1826 = vmul.f32 %v1825, 0.6931472
  %v1827 = vlog2.pop %v1800
  %v1828 = vmul.f32 %v1827, 0.6931472
  %v1829 = vlog2.pop %v1801
  %v1830 = vmul.f32 %v1829, 0.6931472
  %v1831 = vlog2.pop %v1802
  %v1832 = vmul.f32 %v1831, 0.6931472
  %v1833 = vlog2.pop %v1803
  %v1834 = vmul.f32 %v1833, 0.6931472
  %v1835 = vlog2.pop %v1804
  %v1836 = vmul.f32 %v1835, 0.6931472
  %v1837 = vadd.f32 %v1709, %v1806
  %v1838 = vadd.f32 %v1710, %v1808
  %v1839 = vadd.f32 %v1711, %v1810
  %v1840 = vadd.f32 %v1712, %v1812
  %v1841 = vadd.f32 %v1713, %v1814
  %v1842 = vadd.f32 %v1714, %v1816
  %v1843 = vadd.f32 %v1715, %v1818
  %v1844 = vadd.f32 %v1716, %v1820
  %v1845 = vadd.f32 %v1717, %v1822
  %v1846 = vadd.f32 %v1718, %v1824
  %v1847 = vadd.f32 %v1719, %v1826
  %v1848 = vadd.f32 %v1720, %v1828
  %v1849 = vadd.f32 %v1721, %v1830
  %v1850 = vadd.f32 %v1722, %v1832
  %v1851 = vadd.f32 %v1723, %v1834
  %v1852 = vadd.f32 %v1724, %v1836
  %vm1853 = vcmask 7168
  %1854 = vst.msk [vmem:[%s5] sm:$0xff] %vm1853, %v1837
  %1855 = vst.msk [vmem:[%s5 + $0x8] sm:$0xff] %vm1853, %v1838
  %1856 = vst.msk [vmem:[%s5 + $0x10] sm:$0xff] %vm1853, %v1839
  %1857 = vst.msk [vmem:[%s5 + $0x18] sm:$0xff] %vm1853, %v1840
  %1858 = vst.msk [vmem:[%s5 + $0x20] sm:$0xff] %vm1853, %v1841
  %1859 = vst.msk [vmem:[%s5 + $0x28] sm:$0xff] %vm1853, %v1842
  %1860 = vst.msk [vmem:[%s5 + $0x30] sm:$0xff] %vm1853, %v1843
  %1861 = vst.msk [vmem:[%s5 + $0x38] sm:$0xff] %vm1853, %v1844
  %1862 = vst.msk [vmem:[%s5 + $0x40] sm:$0xff] %vm1853, %v1845
  %1863 = vst.msk [vmem:[%s5 + $0x48] sm:$0xff] %vm1853, %v1846
  %1864 = vst.msk [vmem:[%s5 + $0x50] sm:$0xff] %vm1853, %v1847
  %1865 = vst.msk [vmem:[%s5 + $0x58] sm:$0xff] %vm1853, %v1848
  %1866 = vst.msk [vmem:[%s5 + $0x60] sm:$0xff] %vm1853, %v1849
  %1867 = vst.msk [vmem:[%s5 + $0x68] sm:$0xff] %vm1853, %v1850
  %1868 = vst.msk [vmem:[%s5 + $0x70] sm:$0xff] %vm1853, %v1851
  %1869 = vst.msk [vmem:[%s5 + $0x78] sm:$0xff] %vm1853, %v1852
  // Predicated region
  $region22: #{tpu_custom_call.1} parent=0 // pred_check
    _
  $region23: #{tpu_custom_call.1} parent=0 // pred_check_branch
    %1871 = sbr.rel (0) target = $region25
  $region24: #{tpu_custom_call.1} parent=0 // pred_region
    _
  $region25: #{tpu_custom_call.1} parent=0 // pred_fallthru
    _
  // Predicated region
  $region26: #{tpu_custom_call.1} parent=0 // pred_check
    _
  $region27: #{tpu_custom_call.1} parent=0 // pred_check_branch
    %1873 = sbr.rel (0) target = $region29
  $region28: #{tpu_custom_call.1} parent=0 // pred_region
    _
  $region29: #{tpu_custom_call.1} parent=0 // pred_fallthru
    _

</llo_original>
